<compile_context>
chip_gen: v6e
topology: v6e:2x2x1
jax: 0.10.0
libtpu: 0.0.40
codegen_flags: <defaults>
</compile_context>

<pallas_src>
import math

import jax
import jax.numpy as jnp
from jax.experimental import pallas as pl
from jax.experimental.pallas import tpu as pltpu


# ---------------------------------------------------------------------------
# Fused self-attention kernel (one grid step == B_blk batch rows, all heads)
# ---------------------------------------------------------------------------

def _make_fused_attention_kernel(H, Dh, E, inv_scale, has_mask, matmul_dtype):
    def _mxu(x):
        # Optionally feed the MXU with bf16 operands (v6e/v7x fast path);
        # accumulation stays f32 via preferred_element_type.
        return x if matmul_dtype is None else x.astype(matmul_dtype)

    def kernel(*refs):
        if has_mask:
            v_in, k_in, q_in, m_in, wv, bv, wk, bk, wo, bo, o_ref = refs
        else:
            v_in, k_in, q_in, wv, bv, wk, bk, wo, bo, o_ref = refs

        B, Lv, _ = v_in.shape
        _, Lk, _ = k_in.shape
        _, Lq, _ = q_in.shape

        # ---- fused V / K projections: two big (B*L, E) @ (E, E) matmuls ----
        v2 = jnp.dot(_mxu(v_in[...].reshape(B * Lv, E)), _mxu(wv[...]),
                     preferred_element_type=jnp.float32) + bv[...]
        k2 = jnp.dot(_mxu(k_in[...].reshape(B * Lk, E)), _mxu(wk[...]),
                     preferred_element_type=jnp.float32) + bk[...]
        # Original PyTorch bug kept: the query projection is discarded; the RAW
        # query is used.  1/sqrt(embedded_size) is folded into q once.
        q2 = q_in[...].reshape(B * Lq, E) * inv_scale

        v3 = v2.reshape(B, Lv, E)
        k3 = k2.reshape(B, Lk, E)
        q3 = q2.reshape(B, Lq, E)

        # ---- per-head QK^T (B-batched dots) stacked into one slab ----
        energy = jnp.stack(
            [jnp.einsum('bqd,bkd->bqk',
                        _mxu(q3[:, :, h * Dh:(h + 1) * Dh]),
                        _mxu(k3[:, :, h * Dh:(h + 1) * Dh]),
                        preferred_element_type=jnp.float32)
             for h in range(H)], axis=1)                        # (B, H, Lq, Lk)

        if has_mask:
            # mask block is (B, Lq_m, Lk), Lq_m in {1, Lq}; single compare,
            # broadcast over heads (and query rows) in-kernel.
            mask_b = m_in[...][:, None, :, :]                    # (B, 1, Lq_m, Lk)
            energy = jnp.where(mask_b == 0.0, -1e20, energy)     # masked_fill(mask==0, -1e20)

        # ---- numerically-stable softmax over keys, done ONCE for all heads ----
        energy = energy - jnp.max(energy, axis=-1, keepdims=True)
        p = jnp.exp(energy)
        inv_denom = pl.reciprocal(jnp.sum(p, axis=-1, keepdims=True), approx=True)
        att = p * inv_denom                                      # (B, H, Lq, Lk)

        # ---- per-head att @ V (B-batched dots), heads concatenated along lanes ----
        ctx = jnp.concatenate(
            [jnp.einsum('bqk,bkd->bqd',
                        _mxu(att[:, h]),
                        _mxu(v3[:, :, h * Dh:(h + 1) * Dh]),
                        preferred_element_type=jnp.float32)
             for h in range(H)], axis=-1)                        # (B, Lq, E)

        # ---- fc_out as ONE (B*Lq, E) @ (E, E) matmul ----
        out = jnp.dot(_mxu(ctx.reshape(B * Lq, E)), _mxu(wo[...]),
                      preferred_element_type=jnp.float32) + bo[...]
        # TODO(synk): output lane width is E=32 (<128) so stores are masked; a
        # lane-dense layout would need the caller to accept a reshaped output.
        o_ref[...] = out.reshape(B, Lq, E).astype(o_ref.dtype)

    return kernel


# ---------------------------------------------------------------------------
# Wrapper
# ---------------------------------------------------------------------------

def _choose_batch_block(N, Lq):
    """Target >= 256 rows (B_blk*Lq) per step for MXU fill, but keep >= 2 grid
    steps when the batch allows it so v7x's two TensorCores both get work."""
    bb = max(1, min(N, 256 // max(Lq, 1)))
    if N >= 2 and N < 2 * bb:
        bb = max(1, -(-N // 2))        # cdiv(N, 2) -> at least 2 steps
    while N % bb:                      # make it divide N (no ragged blocks)
        bb -= 1
    return bb


def _prepare_mask(mask, N, Lq, Lk):
    """Normalize a torch-style broadcastable mask to (N, Lq_m, Lk) float32 with
    Lq_m in {1, Lq}; the head axis (if present) must be broadcast (size 1)."""
    m = jnp.asarray(mask)
    if m.ndim == 4:
        assert m.shape[1] == 1, "per-head masks are not supported"
        m = m[:, 0]
    elif m.ndim == 2:
        m = m[:, None, :]
    assert m.ndim == 3
    m = m.astype(jnp.float32)
    m = jnp.broadcast_to(m, (N, m.shape[1], Lk))
    assert m.shape[1] in (1, Lq)
    return m


def self_attention_forward(params, values, keys, query, mask, *,
                           embedded_size, heads, batch_block=None,
                           matmul_dtype=None):
    """Fused Pallas forward of the PyTorch SelfAttention module."""
    N, Lq, E = query.shape
    Lk = keys.shape[1]
    Lv = values.shape[1]
    assert E == embedded_size
    assert Lv == Lk, "value_len must equal key_len (required by the torch einsum)"
    H = heads
    Dh = E // H
    assert H * Dh == E, "embed_size must be divisible by heads"
    inv_scale = 1.0 / math.sqrt(float(embedded_size))
    has_mask = mask is not None

    if batch_block is None:
        batch_block = _choose_batch_block(N, Lq)
    assert N % batch_block == 0
    num_blocks = N // batch_block

    inputs = [values, keys, query]
    in_specs = [
        pl.BlockSpec((batch_block, Lv, E), lambda n: (n, 0, 0)),
        pl.BlockSpec((batch_block, Lk, E), lambda n: (n, 0, 0)),
        pl.BlockSpec((batch_block, Lq, E), lambda n: (n, 0, 0)),
    ]
    if has_mask:
        mask_n = _prepare_mask(mask, N, Lq, Lk)
        inputs.append(mask_n)
        in_specs.append(
            pl.BlockSpec((batch_block, mask_n.shape[1], Lk), lambda n: (n, 0, 0)))

    inputs += [params['wv'], params['bv'], params['wk'], params['bk'],
               params['wo'], params['bo']]
    in_specs += [
        pl.BlockSpec((E, E), lambda n: (0, 0)),
        pl.BlockSpec((1, E), lambda n: (0, 0)),
        pl.BlockSpec((E, E), lambda n: (0, 0)),
        pl.BlockSpec((1, E), lambda n: (0, 0)),
        pl.BlockSpec((E, E), lambda n: (0, 0)),
        pl.BlockSpec((1, E), lambda n: (0, 0)),
    ]

    # VMEM is tiny at these shapes; if E / seq_len / batch_block grow, re-derive the
    # block budget against v7x's 64 MiB VMEM (32 MiB default scoped limit) — roughly
    # half of what v6e would take — and raise vmem_limit_bytes via CompilerParams.
    return pl.pallas_call(
        _make_fused_attention_kernel(H, Dh, E, inv_scale, has_mask, matmul_dtype),
        out_shape=jax.ShapeDtypeStruct((N, Lq, E), jnp.float32),
        grid=(num_blocks,),
        in_specs=in_specs,
        out_specs=pl.BlockSpec((batch_block, Lq, E), lambda n: (n, 0, 0)),
        compiler_params=pltpu.CompilerParams(
            dimension_semantics=("parallel",)),
    )(*inputs)


# ---------------------------------------------------------------------------
# Pure-JAX reference (mirrors the torch forward exactly, bugs included)
# ---------------------------------------------------------------------------

def self_attention_ref(params, values, keys, query, mask, *, embedded_size, heads):
    N, Lq, E = query.shape
    Lk = keys.shape[1]
    H = heads
    Dh = E // H
    with jax.default_matmul_precision("highest"):
        v = values @ params['wv'] + params['bv']
        k = keys @ params['wk'] + params['bk']
        _discarded = query @ params['wq'] + params['bq']   # computed then discarded (bug)
        v = v.reshape(N, Lk, H, Dh)
        k = k.reshape(N, Lk, H, Dh)
        q = query.reshape(N, Lq, H, Dh)                    # raw query (bug)
        energy = jnp.einsum('nqhd,nkhd->nhqk', q, k)
        if mask is not None:
            energy = jnp.where(mask == 0, jnp.float32(-1e20), energy)
        att = jax.nn.softmax(energy / math.sqrt(float(embedded_size)), axis=3)
        out = jnp.einsum('nhql,nlhd->nqhd', att, v).reshape(N, Lq, E)
        return out @ params['wo'] + params['bo']


# ---------------------------------------------------------------------------
# Deterministic parameter init (nn.Linear default init; weights stored
# pre-transposed as (in_features, out_features))
# ---------------------------------------------------------------------------

def init_linear(key, din, dout):
    k1, k2 = jax.random.split(key)
    bound = 1.0 / math.sqrt(din)
    w = jax.random.uniform(k1, (din, dout), jnp.float32, -bound, bound)
    b = jax.random.uniform(k2, (1, dout), jnp.float32, -bound, bound)
    return w, b


def init_self_attention(key, embedded_size):
    ks = jax.random.split(key, 4)
    wv, bv = init_linear(ks[0], embedded_size, embedded_size)
    wk, bk = init_linear(ks[1], embedded_size, embedded_size)
    wq, bq = init_linear(ks[2], embedded_size, embedded_size)   # present but unused (bug)
    wo, bo = init_linear(ks[3], embedded_size, embedded_size)
    return dict(wv=wv, bv=bv, wk=wk, bk=bk, wq=wq, bq=bq, wo=wo, bo=bo)


# ---------------------------------------------------------------------------

if __name__ == "__main__":
    E, H = 32, 4          # embedded_size, heads  (head_dim = 8)
    N, L = 2, 8           # batch, seq_len

    key = jax.random.PRNGKey(0)
    kp, kv, kk, kq = jax.random.split(key, 4)
    params = init_self_attention(kp, E)

    values = jax.random.normal(kv, (N, L, E), jnp.float32)
    keys_x = jax.random.normal(kk, (N, L, E), jnp.float32)
    query = jax.random.normal(kq, (N, L, E), jnp.float32)

    # src-style padding mask (N, 1, 1, Lk): last two key positions masked out.
    mask = jnp.ones((N, 1, 1, L), jnp.float32).at[:, :, :, -2:].set(0.0)

    out_masked = self_attention_forward(params, values, keys_x, query, mask,
                                        embedded_size=E, heads=H)
    out_nomask = self_attention_forward(params, values, keys_x, query, None,
                                        embedded_size=E, heads=H)
    # bf16-MXU variant (v6e/v7x fast path); softmax math stays f32.
    out_bf16 = self_attention_forward(params, values, keys_x, query, mask,
                                      embedded_size=E, heads=H,
                                      matmul_dtype=jnp.bfloat16)
    jax.block_until_ready((out_masked, out_nomask, out_bf16))

    ref_masked = self_attention_ref(params, values, keys_x, query, mask,
                                    embedded_size=E, heads=H)
    ref_nomask = self_attention_ref(params, values, keys_x, query, None,
                                    embedded_size=E, heads=H)

    assert out_masked.shape == (N, L, E) and out_masked.dtype == jnp.float32
    assert out_nomask.shape == (N, L, E)
    err_m = float(jnp.max(jnp.abs(out_masked - ref_masked)))
    err_n = float(jnp.max(jnp.abs(out_nomask - ref_nomask)))
    err_b = float(jnp.max(jnp.abs(out_bf16 - ref_masked)))
    assert err_m < 2e-2 and err_n < 2e-2, (err_m, err_n)
    assert err_b < 1e-1, err_b
    print("KERNEL_OK")
</pallas_src>

<mosaic_0001>
module attributes {stable_mosaic.version = 11 : i64} {
  func.func @kernel(%arg0: i32, %arg1: memref<1x8x32xf32, #tpu.memory_space<vmem>>, %arg2: memref<1x8x32xf32, #tpu.memory_space<vmem>>, %arg3: memref<1x8x32xf32, #tpu.memory_space<vmem>>, %arg4: memref<1x1x8xf32, #tpu.memory_space<vmem>>, %arg5: memref<32x32xf32, #tpu.memory_space<vmem>>, %arg6: memref<1x32xf32, #tpu.memory_space<vmem>>, %arg7: memref<32x32xf32, #tpu.memory_space<vmem>>, %arg8: memref<1x32xf32, #tpu.memory_space<vmem>>, %arg9: memref<32x32xf32, #tpu.memory_space<vmem>>, %arg10: memref<1x32xf32, #tpu.memory_space<vmem>>, %arg11: memref<1x8x32xf32, #tpu.memory_space<vmem>>) attributes {dimension_semantics = [#tpu.dimension_semantics<parallel>], iteration_bounds = array<i64: 2>, scalar_prefetch = 0 : i64, scratch_operands = 0 : i64, tpu.core_type = #tpu.core_type<tc>, window_params = [{transform_indices = @transform_0, window_bounds = array<i64: 1, 8, 32>}, {transform_indices = @transform_1, window_bounds = array<i64: 1, 8, 32>}, {transform_indices = @transform_2, window_bounds = array<i64: 1, 8, 32>}, {transform_indices = @transform_3, window_bounds = array<i64: 1, 1, 8>}, {pipeline_mode = #tpu.pipeline_mode<synchronous>, transform_indices = @transform_4, window_bounds = array<i64: 32, 32>}, {pipeline_mode = #tpu.pipeline_mode<synchronous>, transform_indices = @transform_5, window_bounds = array<i64: 1, 32>}, {pipeline_mode = #tpu.pipeline_mode<synchronous>, transform_indices = @transform_6, window_bounds = array<i64: 32, 32>}, {pipeline_mode = #tpu.pipeline_mode<synchronous>, transform_indices = @transform_7, window_bounds = array<i64: 1, 32>}, {pipeline_mode = #tpu.pipeline_mode<synchronous>, transform_indices = @transform_8, window_bounds = array<i64: 32, 32>}, {pipeline_mode = #tpu.pipeline_mode<synchronous>, transform_indices = @transform_9, window_bounds = array<i64: 1, 32>}, {transform_indices = @transform_10, window_bounds = array<i64: 1, 8, 32>}]} {
    %c0 = arith.constant 0 : index
    %c0_0 = arith.constant 0 : index
    %c0_1 = arith.constant 0 : index
    %0 = vector.load %arg1[%c0, %c0_0, %c0_1] : memref<1x8x32xf32, #tpu.memory_space<vmem>>, vector<1x8x32xf32>
    %1 = vector.shape_cast %0 : vector<1x8x32xf32> to vector<8x32xf32>
    %c0_2 = arith.constant 0 : index
    %c0_3 = arith.constant 0 : index
    %2 = vector.load %arg5[%c0_2, %c0_3] : memref<32x32xf32, #tpu.memory_space<vmem>>, vector<32x32xf32>
    %cst = arith.constant dense<0.000000e+00> : vector<8x32xf32>
    %3 = tpu.matmul %1, %2, %cst {dimension_numbers = #tpu.dot_dimension_numbers<[1], [0], [0], [1], [0, 0, 1, 1], [], []>} : vector<8x32xf32>, vector<32x32xf32>, vector<8x32xf32> -> vector<8x32xf32>
    %c0_4 = arith.constant 0 : index
    %c0_5 = arith.constant 0 : index
    %4 = vector.load %arg6[%c0_4, %c0_5] : memref<1x32xf32, #tpu.memory_space<vmem>>, vector<1x32xf32>
    %5 = vector.broadcast %4 : vector<1x32xf32> to vector<8x32xf32>
    %6 = arith.addf %3, %5 : vector<8x32xf32>
    %c0_6 = arith.constant 0 : index
    %c0_7 = arith.constant 0 : index
    %c0_8 = arith.constant 0 : index
    %7 = vector.load %arg2[%c0_6, %c0_7, %c0_8] : memref<1x8x32xf32, #tpu.memory_space<vmem>>, vector<1x8x32xf32>
    %8 = vector.shape_cast %7 : vector<1x8x32xf32> to vector<8x32xf32>
    %c0_9 = arith.constant 0 : index
    %c0_10 = arith.constant 0 : index
    %9 = vector.load %arg7[%c0_9, %c0_10] : memref<32x32xf32, #tpu.memory_space<vmem>>, vector<32x32xf32>
    %cst_11 = arith.constant dense<0.000000e+00> : vector<8x32xf32>
    %10 = tpu.matmul %8, %9, %cst_11 {dimension_numbers = #tpu.dot_dimension_numbers<[1], [0], [0], [1], [0, 0, 1, 1], [], []>} : vector<8x32xf32>, vector<32x32xf32>, vector<8x32xf32> -> vector<8x32xf32>
    %c0_12 = arith.constant 0 : index
    %c0_13 = arith.constant 0 : index
    %11 = vector.load %arg8[%c0_12, %c0_13] : memref<1x32xf32, #tpu.memory_space<vmem>>, vector<1x32xf32>
    %12 = vector.broadcast %11 : vector<1x32xf32> to vector<8x32xf32>
    %13 = arith.addf %10, %12 : vector<8x32xf32>
    %c0_14 = arith.constant 0 : index
    %c0_15 = arith.constant 0 : index
    %c0_16 = arith.constant 0 : index
    %14 = vector.load %arg3[%c0_14, %c0_15, %c0_16] : memref<1x8x32xf32, #tpu.memory_space<vmem>>, vector<1x8x32xf32>
    %15 = vector.shape_cast %14 : vector<1x8x32xf32> to vector<8x32xf32>
    %cst_17 = arith.constant 0.176776692 : f32
    %16 = vector.broadcast %cst_17 : f32 to vector<8x32xf32>
    %17 = arith.mulf %15, %16 : vector<8x32xf32>
    %18 = vector.shape_cast %6 : vector<8x32xf32> to vector<1x8x32xf32>
    %19 = vector.shape_cast %13 : vector<8x32xf32> to vector<1x8x32xf32>
    %20 = vector.shape_cast %17 : vector<8x32xf32> to vector<1x8x32xf32>
    %21 = vector.extract_strided_slice %20 {offsets = [0, 0, 0], sizes = [1, 8, 8], strides = [1, 1, 1]} : vector<1x8x32xf32> to vector<1x8x8xf32>
    %22 = vector.extract_strided_slice %19 {offsets = [0, 0, 0], sizes = [1, 8, 8], strides = [1, 1, 1]} : vector<1x8x32xf32> to vector<1x8x8xf32>
    "tpu.trace_start"() <{level = 10 : i32, message = "bqd,bkd->bqk"}> : () -> ()
    %cst_18 = arith.constant dense<0.000000e+00> : vector<1x8x8xf32>
    %23 = tpu.matmul %21, %22, %cst_18 {dimension_numbers = #tpu.dot_dimension_numbers<[2], [2], [1], [1], [0, 0, 0, 1, 1, 1], [0], [0]>} : vector<1x8x8xf32>, vector<1x8x8xf32>, vector<1x8x8xf32> -> vector<1x8x8xf32>
    "tpu.trace_stop"() : () -> ()
    %24 = vector.extract_strided_slice %20 {offsets = [0, 0, 8], sizes = [1, 8, 8], strides = [1, 1, 1]} : vector<1x8x32xf32> to vector<1x8x8xf32>
    %25 = vector.extract_strided_slice %19 {offsets = [0, 0, 8], sizes = [1, 8, 8], strides = [1, 1, 1]} : vector<1x8x32xf32> to vector<1x8x8xf32>
    "tpu.trace_start"() <{level = 10 : i32, message = "bqd,bkd->bqk"}> : () -> ()
    %cst_19 = arith.constant dense<0.000000e+00> : vector<1x8x8xf32>
    %26 = tpu.matmul %24, %25, %cst_19 {dimension_numbers = #tpu.dot_dimension_numbers<[2], [2], [1], [1], [0, 0, 0, 1, 1, 1], [0], [0]>} : vector<1x8x8xf32>, vector<1x8x8xf32>, vector<1x8x8xf32> -> vector<1x8x8xf32>
    "tpu.trace_stop"() : () -> ()
    %27 = vector.extract_strided_slice %20 {offsets = [0, 0, 16], sizes = [1, 8, 8], strides = [1, 1, 1]} : vector<1x8x32xf32> to vector<1x8x8xf32>
    %28 = vector.extract_strided_slice %19 {offsets = [0, 0, 16], sizes = [1, 8, 8], strides = [1, 1, 1]} : vector<1x8x32xf32> to vector<1x8x8xf32>
    "tpu.trace_start"() <{level = 10 : i32, message = "bqd,bkd->bqk"}> : () -> ()
    %cst_20 = arith.constant dense<0.000000e+00> : vector<1x8x8xf32>
    %29 = tpu.matmul %27, %28, %cst_20 {dimension_numbers = #tpu.dot_dimension_numbers<[2], [2], [1], [1], [0, 0, 0, 1, 1, 1], [0], [0]>} : vector<1x8x8xf32>, vector<1x8x8xf32>, vector<1x8x8xf32> -> vector<1x8x8xf32>
    "tpu.trace_stop"() : () -> ()
    %30 = vector.extract_strided_slice %20 {offsets = [0, 0, 24], sizes = [1, 8, 8], strides = [1, 1, 1]} : vector<1x8x32xf32> to vector<1x8x8xf32>
    %31 = vector.extract_strided_slice %19 {offsets = [0, 0, 24], sizes = [1, 8, 8], strides = [1, 1, 1]} : vector<1x8x32xf32> to vector<1x8x8xf32>
    "tpu.trace_start"() <{level = 10 : i32, message = "bqd,bkd->bqk"}> : () -> ()
    %cst_21 = arith.constant dense<0.000000e+00> : vector<1x8x8xf32>
    %32 = tpu.matmul %30, %31, %cst_21 {dimension_numbers = #tpu.dot_dimension_numbers<[2], [2], [1], [1], [0, 0, 0, 1, 1, 1], [0], [0]>} : vector<1x8x8xf32>, vector<1x8x8xf32>, vector<1x8x8xf32> -> vector<1x8x8xf32>
    "tpu.trace_stop"() : () -> ()
    %33 = vector.shape_cast %23 : vector<1x8x8xf32> to vector<1x1x8x8xf32>
    %34 = vector.shape_cast %26 : vector<1x8x8xf32> to vector<1x1x8x8xf32>
    %35 = vector.shape_cast %29 : vector<1x8x8xf32> to vector<1x1x8x8xf32>
    %36 = vector.shape_cast %32 : vector<1x8x8xf32> to vector<1x1x8x8xf32>
    %37 = tpu.concatenate %33, %34, %35, %36 in 1 : vector<1x1x8x8xf32>, vector<1x1x8x8xf32>, vector<1x1x8x8xf32>, vector<1x1x8x8xf32> -> vector<1x4x8x8xf32>
    %c0_22 = arith.constant 0 : index
    %c0_23 = arith.constant 0 : index
    %c0_24 = arith.constant 0 : index
    %38 = vector.load %arg4[%c0_22, %c0_23, %c0_24] : memref<1x1x8xf32, #tpu.memory_space<vmem>>, vector<1x1x8xf32>
    %39 = vector.shape_cast %38 : vector<1x1x8xf32> to vector<1x1x1x8xf32>
    %cst_25 = arith.constant 0.000000e+00 : f32
    %40 = vector.broadcast %cst_25 : f32 to vector<1x1x1x8xf32>
    %41 = arith.cmpf oeq, %39, %40 : vector<1x1x1x8xf32>
    %cst_26 = arith.constant -1.000000e+20 : f32
    %42 = vector.shape_cast %41 : vector<1x1x1x8xi1> to vector<1x1x1x8xi1>
    %43 = vector.broadcast %42 : vector<1x1x1x8xi1> to vector<1x4x8x8xi1>
    %44 = vector.broadcast %cst_26 : f32 to vector<1x4x8x8xf32>
    %45 = arith.select %43, %44, %37 : vector<1x4x8x8xi1>, vector<1x4x8x8xf32>
    %cst_27 = arith.constant dense<0xFF800000> : vector<1x4x8xf32>
    %46 = vector.multi_reduction <maximumf>, %45, %cst_27 [3] : vector<1x4x8x8xf32> to vector<1x4x8xf32>
    %47 = vector.shape_cast %46 : vector<1x4x8xf32> to vector<1x4x8x1xf32>
    %48 = vector.broadcast %47 : vector<1x4x8x1xf32> to vector<1x4x8x8xf32>
    %49 = arith.subf %45, %48 : vector<1x4x8x8xf32>
    %50 = math.exp %49 : vector<1x4x8x8xf32>
    %cst_28 = arith.constant dense<0.000000e+00> : vector<1x4x8xf32>
    %51 = vector.multi_reduction <add>, %50, %cst_28 [3] : vector<1x4x8x8xf32> to vector<1x4x8xf32>
    %52 = vector.shape_cast %51 : vector<1x4x8xf32> to vector<1x4x8x1xf32>
    %53 = tpu.reciprocal %52 {approx = true} : vector<1x4x8x1xf32> -> vector<1x4x8x1xf32>
    %54 = vector.broadcast %53 : vector<1x4x8x1xf32> to vector<1x4x8x8xf32>
    %55 = arith.mulf %50, %54 : vector<1x4x8x8xf32>
    %56 = vector.extract_strided_slice %55 {offsets = [0, 0, 0, 0], sizes = [1, 1, 8, 8], strides = [1, 1, 1, 1]} : vector<1x4x8x8xf32> to vector<1x1x8x8xf32>
    %57 = vector.shape_cast %56 : vector<1x1x8x8xf32> to vector<1x8x8xf32>
    %58 = vector.extract_strided_slice %18 {offsets = [0, 0, 0], sizes = [1, 8, 8], strides = [1, 1, 1]} : vector<1x8x32xf32> to vector<1x8x8xf32>
    "tpu.trace_start"() <{level = 10 : i32, message = "bqk,bkd->bqd"}> : () -> ()
    %cst_29 = arith.constant dense<0.000000e+00> : vector<1x8x8xf32>
    %59 = tpu.matmul %57, %58, %cst_29 {dimension_numbers = #tpu.dot_dimension_numbers<[2], [1], [1], [2], [0, 0, 0, 1, 1, 2], [0], [0]>} : vector<1x8x8xf32>, vector<1x8x8xf32>, vector<1x8x8xf32> -> vector<1x8x8xf32>
    "tpu.trace_stop"() : () -> ()
    %60 = vector.extract_strided_slice %55 {offsets = [0, 1, 0, 0], sizes = [1, 1, 8, 8], strides = [1, 1, 1, 1]} : vector<1x4x8x8xf32> to vector<1x1x8x8xf32>
    %61 = vector.shape_cast %60 : vector<1x1x8x8xf32> to vector<1x8x8xf32>
    %62 = vector.extract_strided_slice %18 {offsets = [0, 0, 8], sizes = [1, 8, 8], strides = [1, 1, 1]} : vector<1x8x32xf32> to vector<1x8x8xf32>
    "tpu.trace_start"() <{level = 10 : i32, message = "bqk,bkd->bqd"}> : () -> ()
    %cst_30 = arith.constant dense<0.000000e+00> : vector<1x8x8xf32>
    %63 = tpu.matmul %61, %62, %cst_30 {dimension_numbers = #tpu.dot_dimension_numbers<[2], [1], [1], [2], [0, 0, 0, 1, 1, 2], [0], [0]>} : vector<1x8x8xf32>, vector<1x8x8xf32>, vector<1x8x8xf32> -> vector<1x8x8xf32>
    "tpu.trace_stop"() : () -> ()
    %64 = vector.extract_strided_slice %55 {offsets = [0, 2, 0, 0], sizes = [1, 1, 8, 8], strides = [1, 1, 1, 1]} : vector<1x4x8x8xf32> to vector<1x1x8x8xf32>
    %65 = vector.shape_cast %64 : vector<1x1x8x8xf32> to vector<1x8x8xf32>
    %66 = vector.extract_strided_slice %18 {offsets = [0, 0, 16], sizes = [1, 8, 8], strides = [1, 1, 1]} : vector<1x8x32xf32> to vector<1x8x8xf32>
    "tpu.trace_start"() <{level = 10 : i32, message = "bqk,bkd->bqd"}> : () -> ()
    %cst_31 = arith.constant dense<0.000000e+00> : vector<1x8x8xf32>
    %67 = tpu.matmul %65, %66, %cst_31 {dimension_numbers = #tpu.dot_dimension_numbers<[2], [1], [1], [2], [0, 0, 0, 1, 1, 2], [0], [0]>} : vector<1x8x8xf32>, vector<1x8x8xf32>, vector<1x8x8xf32> -> vector<1x8x8xf32>
    "tpu.trace_stop"() : () -> ()
    %68 = vector.extract_strided_slice %55 {offsets = [0, 3, 0, 0], sizes = [1, 1, 8, 8], strides = [1, 1, 1, 1]} : vector<1x4x8x8xf32> to vector<1x1x8x8xf32>
    %69 = vector.shape_cast %68 : vector<1x1x8x8xf32> to vector<1x8x8xf32>
    %70 = vector.extract_strided_slice %18 {offsets = [0, 0, 24], sizes = [1, 8, 8], strides = [1, 1, 1]} : vector<1x8x32xf32> to vector<1x8x8xf32>
    "tpu.trace_start"() <{level = 10 : i32, message = "bqk,bkd->bqd"}> : () -> ()
    %cst_32 = arith.constant dense<0.000000e+00> : vector<1x8x8xf32>
    %71 = tpu.matmul %69, %70, %cst_32 {dimension_numbers = #tpu.dot_dimension_numbers<[2], [1], [1], [2], [0, 0, 0, 1, 1, 2], [0], [0]>} : vector<1x8x8xf32>, vector<1x8x8xf32>, vector<1x8x8xf32> -> vector<1x8x8xf32>
    "tpu.trace_stop"() : () -> ()
    %72 = tpu.concatenate %59, %63, %67, %71 in 2 : vector<1x8x8xf32>, vector<1x8x8xf32>, vector<1x8x8xf32>, vector<1x8x8xf32> -> vector<1x8x32xf32>
    %73 = vector.shape_cast %72 : vector<1x8x32xf32> to vector<8x32xf32>
    %c0_33 = arith.constant 0 : index
    %c0_34 = arith.constant 0 : index
    %74 = vector.load %arg9[%c0_33, %c0_34] : memref<32x32xf32, #tpu.memory_space<vmem>>, vector<32x32xf32>
    %cst_35 = arith.constant dense<0.000000e+00> : vector<8x32xf32>
    %75 = tpu.matmul %73, %74, %cst_35 {dimension_numbers = #tpu.dot_dimension_numbers<[1], [0], [0], [1], [0, 0, 1, 1], [], []>} : vector<8x32xf32>, vector<32x32xf32>, vector<8x32xf32> -> vector<8x32xf32>
    %c0_36 = arith.constant 0 : index
    %c0_37 = arith.constant 0 : index
    %76 = vector.load %arg10[%c0_36, %c0_37] : memref<1x32xf32, #tpu.memory_space<vmem>>, vector<1x32xf32>
    %77 = vector.broadcast %76 : vector<1x32xf32> to vector<8x32xf32>
    %78 = arith.addf %75, %77 : vector<8x32xf32>
    %79 = vector.shape_cast %78 : vector<8x32xf32> to vector<1x8x32xf32>
    %c0_38 = arith.constant 0 : index
    %c0_39 = arith.constant 0 : index
    %c0_40 = arith.constant 0 : index
    %80 = vector.load %arg11[%c0_38, %c0_39, %c0_40] : memref<1x8x32xf32, #tpu.memory_space<vmem>>, vector<1x8x32xf32>
    tpu.vector_store %arg11[%c0_38, %c0_39, %c0_40], %79 {strides = array<i32>} : memref<1x8x32xf32, #tpu.memory_space<vmem>>, vector<1x8x32xf32>,
    return
  }
  func.func @transform_0(%arg0: i32) -> (i32, i32, i32) {
    %c0_i32 = arith.constant 0 : i32
    %c0_i32_0 = arith.constant 0 : i32
    %c0_i32_1 = arith.constant 0 : i32
    return %arg0, %c0_i32, %c0_i32_0 : i32, i32, i32
  }
  func.func @transform_1(%arg0: i32) -> (i32, i32, i32) {
    %c0_i32 = arith.constant 0 : i32
    %c0_i32_0 = arith.constant 0 : i32
    %c0_i32_1 = arith.constant 0 : i32
    return %arg0, %c0_i32, %c0_i32_0 : i32, i32, i32
  }
  func.func @transform_2(%arg0: i32) -> (i32, i32, i32) {
    %c0_i32 = arith.constant 0 : i32
    %c0_i32_0 = arith.constant 0 : i32
    %c0_i32_1 = arith.constant 0 : i32
    return %arg0, %c0_i32, %c0_i32_0 : i32, i32, i32
  }
  func.func @transform_3(%arg0: i32) -> (i32, i32, i32) {
    %c0_i32 = arith.constant 0 : i32
    %c0_i32_0 = arith.constant 0 : i32
    %c0_i32_1 = arith.constant 0 : i32
    return %arg0, %c0_i32, %c0_i32_0 : i32, i32, i32
  }
  func.func @transform_4(%arg0: i32) -> (i32, i32) {
    %c0_i32 = arith.constant 0 : i32
    %c0_i32_0 = arith.constant 0 : i32
    %c0_i32_1 = arith.constant 0 : i32
    return %c0_i32, %c0_i32_0 : i32, i32
  }
  func.func @transform_5(%arg0: i32) -> (i32, i32) {
    %c0_i32 = arith.constant 0 : i32
    %c0_i32_0 = arith.constant 0 : i32
    %c0_i32_1 = arith.constant 0 : i32
    return %c0_i32, %c0_i32_0 : i32, i32
  }
  func.func @transform_6(%arg0: i32) -> (i32, i32) {
    %c0_i32 = arith.constant 0 : i32
    %c0_i32_0 = arith.constant 0 : i32
    %c0_i32_1 = arith.constant 0 : i32
    return %c0_i32, %c0_i32_0 : i32, i32
  }
  func.func @transform_7(%arg0: i32) -> (i32, i32) {
    %c0_i32 = arith.constant 0 : i32
    %c0_i32_0 = arith.constant 0 : i32
    %c0_i32_1 = arith.constant 0 : i32
    return %c0_i32, %c0_i32_0 : i32, i32
  }
  func.func @transform_8(%arg0: i32) -> (i32, i32) {
    %c0_i32 = arith.constant 0 : i32
    %c0_i32_0 = arith.constant 0 : i32
    %c0_i32_1 = arith.constant 0 : i32
    return %c0_i32, %c0_i32_0 : i32, i32
  }
  func.func @transform_9(%arg0: i32) -> (i32, i32) {
    %c0_i32 = arith.constant 0 : i32
    %c0_i32_0 = arith.constant 0 : i32
    %c0_i32_1 = arith.constant 0 : i32
    return %c0_i32, %c0_i32_0 : i32, i32
  }
  func.func @transform_10(%arg0: i32) -> (i32, i32, i32) {
    %c0_i32 = arith.constant 0 : i32
    %c0_i32_0 = arith.constant 0 : i32
    %c0_i32_1 = arith.constant 0 : i32
    return %arg0, %c0_i32, %c0_i32_0 : i32, i32, i32
  }
}

</mosaic_0001>

<llo_original>
// kernel: tpu_custom_call.1
$region0: #{tpu_custom_call.1}
  #allocation0 [shape = 'u32[]', space=smem, size = 0x4, offset = 0x4, fixed_abs, tag = 'smem constant byte address 0x4 - core index']
  #allocation1 [shape = 'u32[144,128]{1,0:T(1,128)}', space=vmem, size = 0x12000, scoped, tag = 'internal scratch']
  %s0 = inlined_call_operand.hbm [shape: f32[2,8,32], index: 0, kind: input, shape index: {}]
  %s1 = inlined_call_operand.hbm [shape: f32[2,8,32], index: 1, kind: input, shape index: {}]
  %s2 = inlined_call_operand.hbm [shape: f32[2,8,32], index: 2, kind: input, shape index: {}]
  %s3 = inlined_call_operand.vmem [shape: f32[2,1,8], index: 3, kind: input, shape index: {}]
  %s4 = inlined_call_operand.hbm [shape: f32[32,32], index: 4, kind: input, shape index: {}]
  %s5 = inlined_call_operand.vmem [shape: f32[1,32], index: 5, kind: input, shape index: {}]
  %s6 = inlined_call_operand.hbm [shape: f32[32,32], index: 6, kind: input, shape index: {}]
  %s7 = inlined_call_operand.vmem [shape: f32[1,32], index: 7, kind: input, shape index: {}]
  %s8 = inlined_call_operand.hbm [shape: f32[32,32], index: 8, kind: input, shape index: {}]
  %s9 = inlined_call_operand.vmem [shape: f32[1,32], index: 9, kind: input, shape index: {}]
  %s10 = inlined_call_operand.hbm [shape: f32[2,8,32], index: 10, kind: output, shape index: {}]
  %s11 = sld [smem:[#allocation0]]
  $region97: #{tpu_custom_call.1} parent=0
    _
  %s13 = ssub.s32 1, %s11
  %s14 = scalar_select 0, %s13, %s11
  $region1: #{tpu_custom_call.1} parent=0
    #allocation2 [shape = 'u8[8192]{0}', space=vmem, size = 0x2000, scoped, tag = 'input window, operand 0']
    #allocation3 [shape = 's32[2]{0}', space=sflag, size = 0x8, scoped, tag = 'scoped memory for tpu_custom_call.1']
    #allocation4 [shape = 's32[2]{0}', space=sflag, size = 0x8, scoped, tag = 'scoped memory for tpu_custom_call.1']
    #allocation5 [shape = 'u8[8192]{0}', space=vmem, size = 0x2000, scoped, tag = 'input window, operand 1']
    #allocation6 [shape = 's32[2]{0}', space=sflag, size = 0x8, scoped, tag = 'scoped memory for tpu_custom_call.1']
    #allocation7 [shape = 'u8[8192]{0}', space=vmem, size = 0x2000, scoped, tag = 'input window, operand 2']
    #allocation8 [shape = 'u8[16384]{0}', space=vmem, size = 0x4000, scoped, tag = 'input window, operand 4, single buffered']
    #allocation9 [shape = 's32[1]{0}', space=sflag, size = 0x4, scoped, tag = 'scoped memory for tpu_custom_call.1']
    #allocation10 [shape = 'u8[16384]{0}', space=vmem, size = 0x4000, scoped, tag = 'input window, operand 6, single buffered']
    #allocation11 [shape = 'u8[16384]{0}', space=vmem, size = 0x4000, scoped, tag = 'input window, operand 8, single buffered']
    #allocation12 [shape = 's32[1]{0}', space=sflag, size = 0x4, scoped, tag = 'scoped memory for tpu_custom_call.1']
    #allocation13 [shape = 'u8[8192]{0}', space=vmem, size = 0x2000, scoped, tag = 'output window, operand 0']
    %15 = vsyncpa [#allocation3], 0
    %s16 = scalar_lea.sflag [#allocation3], 1
    %17 = vsyncpa %s16, 0
    %18 = vsyncpa [#allocation6], 0
    %s19 = scalar_lea.sflag [#allocation6], 1
    %20 = vsyncpa %s19, 0
    %21 = vsyncpa [#allocation9], 0
    %22 = vsyncpa [#allocation12], 0
    %23 = vsyncpa [#allocation4], 0
    %s24 = scalar_lea.sflag [#allocation4], 1
    %25 = vsyncpa %s24, 0
    loop: start=0, step=1, limit=4
    $region2: #{tpu_custom_call.1} parent=1 // loop_pre_header
      _
    $region3: #{tpu_custom_call.1} parent=1 // loop_header
      %s27 = sphi 0, %s31
      %p28 = scmp.ge.s32.totalorder %s27, 4
      %s37 = sphi 0, %s39
      %s40 = sphi 0, %s37
      %s41 = sphi 0, %s40
      %s57 = sphi 0, %s41
      %s63 = sphi 0, %s65
      %s66 = sphi 0, %s63
      %s67 = sphi 0, %s66
      %s83 = sphi 0, %s67
      %s89 = sphi 0, %s91
      %s92 = sphi 0, %s89
      %s93 = sphi 0, %s92
      %s109 = sphi 0, %s93
      %s115 = sphi 0, %s117
      %s118 = sphi 0, %s115
      %s119 = sphi 0, %s118
      %s135 = sphi 0, %s119
      %s139 = sphi 0, %s139
      %s141 = sphi 0, %s139
      %s142 = sphi 0, %s141
      %s156 = sphi 0, %s142
      %s160 = sphi 0, %s160
      %s162 = sphi 0, %s160
      %s163 = sphi 0, %s162
      %s177 = sphi 0, %s163
      %s181 = sphi 0, %s181
      %s183 = sphi 0, %s181
      %s184 = sphi 0, %s183
      %s198 = sphi 0, %s184
      %s202 = sphi 0, %s202
      %s204 = sphi 0, %s202
      %s205 = sphi 0, %s204
      %s219 = sphi 0, %s205
      %s223 = sphi 0, %s223
      %s225 = sphi 0, %s223
      %s226 = sphi 0, %s225
      %s240 = sphi 0, %s226
      %s244 = sphi 0, %s244
      %s246 = sphi 0, %s244
      %s247 = sphi 0, %s246
      %s261 = sphi 0, %s247
      %s267 = sphi 0, %s269
      %s270 = sphi 0, %s267
      %s271 = sphi 0, %s270
      %s287 = sphi 0, %s271
    $region4: #{tpu_custom_call.1} parent=1 // loop_header_branch
      %30 = sbr.rel (%p28) target = $region8
    $region5: #{tpu_custom_call.1} parent=1 // loop_body
      %s32 = ssub.s32 %s27, 1
      %s33 = ssub.s32 %s27, 2
      %s34 = sadd.s32 %s27, 1
      %s35 = ssub.s32 %s27, %s34
      %p36 = scmp.eq.s32.totalorder %s35, 0
      %s38 = sadd.s32 %s37, 1
      %s39 = scalar_select %p36, %s37, %s38
      %p42 = pneg %p36
      %p43 = scmp.eq.s32.totalorder %s27, 1
      %p44 = por %p42, %p43
      %p45 = scmp.ne.s32.totalorder %s37, %s40
      %p46 = scmp.eq.s32.totalorder %s27, 0
      %p47 = por %p45, %p46
      %p48 = scmp.ne.s32.totalorder %s37, %s40
      %p49 = scmp.eq.s32.totalorder %s32, 1
      %p50 = por %p48, %p49
      %p51 = scmp.ne.s32.totalorder %s40, %s41
      %p52 = scmp.eq.s32.totalorder %s32, 0
      %p53 = por %p51, %p52
      %p54 = scmp.ne.s32.totalorder %s40, %s41
      %p55 = scmp.eq.s32.totalorder %s33, 1
      %p56 = por %p54, %p55
      %p58 = scmp.ne.s32.totalorder %s41, %s57
      %p59 = scmp.eq.s32.totalorder %s33, 0
      %p60 = por %p58, %p59
      %s61 = ssub.s32 %s27, %s34
      %p62 = scmp.eq.s32.totalorder %s61, 0
      %s64 = sadd.s32 %s63, 1
      %s65 = scalar_select %p62, %s63, %s64
      %p68 = pneg %p62
      %p69 = scmp.eq.s32.totalorder %s27, 1
      %p70 = por %p68, %p69
      %p71 = scmp.ne.s32.totalorder %s63, %s66
      %p72 = scmp.eq.s32.totalorder %s27, 0
      %p73 = por %p71, %p72
      %p74 = scmp.ne.s32.totalorder %s63, %s66
      %p75 = scmp.eq.s32.totalorder %s32, 1
      %p76 = por %p74, %p75
      %p77 = scmp.ne.s32.totalorder %s66, %s67
      %p78 = scmp.eq.s32.totalorder %s32, 0
      %p79 = por %p77, %p78
      %p80 = scmp.ne.s32.totalorder %s66, %s67
      %p81 = scmp.eq.s32.totalorder %s33, 1
      %p82 = por %p80, %p81
      %p84 = scmp.ne.s32.totalorder %s67, %s83
      %p85 = scmp.eq.s32.totalorder %s33, 0
      %p86 = por %p84, %p85
      %s87 = ssub.s32 %s27, %s34
      %p88 = scmp.eq.s32.totalorder %s87, 0
      %s90 = sadd.s32 %s89, 1
      %s91 = scalar_select %p88, %s89, %s90
      %p94 = pneg %p88
      %p95 = scmp.eq.s32.totalorder %s27, 1
      %p96 = por %p94, %p95
      %p97 = scmp.ne.s32.totalorder %s89, %s92
      %p98 = scmp.eq.s32.totalorder %s27, 0
      %p99 = por %p97, %p98
      %p100 = scmp.ne.s32.totalorder %s89, %s92
      %p101 = scmp.eq.s32.totalorder %s32, 1
      %p102 = por %p100, %p101
      %p103 = scmp.ne.s32.totalorder %s92, %s93
      %p104 = scmp.eq.s32.totalorder %s32, 0
      %p105 = por %p103, %p104
      %p106 = scmp.ne.s32.totalorder %s92, %s93
      %p107 = scmp.eq.s32.totalorder %s33, 1
      %p108 = por %p106, %p107
      %p110 = scmp.ne.s32.totalorder %s93, %s109
      %p111 = scmp.eq.s32.totalorder %s33, 0
      %p112 = por %p110, %p111
      %s113 = ssub.s32 %s27, %s34
      %p114 = scmp.eq.s32.totalorder %s113, 0
      %s116 = sadd.s32 %s115, 1
      %s117 = scalar_select %p114, %s115, %s116
      %p120 = pneg %p114
      %p121 = scmp.eq.s32.totalorder %s27, 1
      %p122 = por %p120, %p121
      %p123 = scmp.ne.s32.totalorder %s115, %s118
      %p124 = scmp.eq.s32.totalorder %s27, 0
      %p125 = por %p123, %p124
      %p126 = scmp.ne.s32.totalorder %s115, %s118
      %p127 = scmp.eq.s32.totalorder %s32, 1
      %p128 = por %p126, %p127
      %p129 = scmp.ne.s32.totalorder %s118, %s119
      %p130 = scmp.eq.s32.totalorder %s32, 0
      %p131 = por %p129, %p130
      %p132 = scmp.ne.s32.totalorder %s118, %s119
      %p133 = scmp.eq.s32.totalorder %s33, 1
      %p134 = por %p132, %p133
      %p136 = scmp.ne.s32.totalorder %s119, %s135
      %p137 = scmp.eq.s32.totalorder %s33, 0
      %p138 = por %p136, %p137
      %s140 = sadd.s32 %s139, 1
      %p143 = scmp.eq.s32.totalorder %s27, 1
      %p144 = scmp.ne.s32.totalorder %s139, %s141
      %p145 = scmp.eq.s32.totalorder %s27, 0
      %p146 = por %p144, %p145
      %p147 = scmp.ne.s32.totalorder %s139, %s141
      %p148 = scmp.eq.s32.totalorder %s32, 1
      %p149 = por %p147, %p148
      %p150 = scmp.ne.s32.totalorder %s141, %s142
      %p151 = scmp.eq.s32.totalorder %s32, 0
      %p152 = por %p150, %p151
      %p153 = scmp.ne.s32.totalorder %s141, %s142
      %p154 = scmp.eq.s32.totalorder %s33, 1
      %p155 = por %p153, %p154
      %p157 = scmp.ne.s32.totalorder %s142, %s156
      %p158 = scmp.eq.s32.totalorder %s33, 0
      %p159 = por %p157, %p158
      %s161 = sadd.s32 %s160, 1
      %p164 = scmp.eq.s32.totalorder %s27, 1
      %p165 = scmp.ne.s32.totalorder %s160, %s162
      %p166 = scmp.eq.s32.totalorder %s27, 0
      %p167 = por %p165, %p166
      %p168 = scmp.ne.s32.totalorder %s160, %s162
      %p169 = scmp.eq.s32.totalorder %s32, 1
      %p170 = por %p168, %p169
      %p171 = scmp.ne.s32.totalorder %s162, %s163
      %p172 = scmp.eq.s32.totalorder %s32, 0
      %p173 = por %p171, %p172
      %p174 = scmp.ne.s32.totalorder %s162, %s163
      %p175 = scmp.eq.s32.totalorder %s33, 1
      %p176 = por %p174, %p175
      %p178 = scmp.ne.s32.totalorder %s163, %s177
      %p179 = scmp.eq.s32.totalorder %s33, 0
      %p180 = por %p178, %p179
      %s182 = sadd.s32 %s181, 1
      %p185 = scmp.eq.s32.totalorder %s27, 1
      %p186 = scmp.ne.s32.totalorder %s181, %s183
      %p187 = scmp.eq.s32.totalorder %s27, 0
      %p188 = por %p186, %p187
      %p189 = scmp.ne.s32.totalorder %s181, %s183
      %p190 = scmp.eq.s32.totalorder %s32, 1
      %p191 = por %p189, %p190
      %p192 = scmp.ne.s32.totalorder %s183, %s184
      %p193 = scmp.eq.s32.totalorder %s32, 0
      %p194 = por %p192, %p193
      %p195 = scmp.ne.s32.totalorder %s183, %s184
      %p196 = scmp.eq.s32.totalorder %s33, 1
      %p197 = por %p195, %p196
      %p199 = scmp.ne.s32.totalorder %s184, %s198
      %p200 = scmp.eq.s32.totalorder %s33, 0
      %p201 = por %p199, %p200
      %s203 = sadd.s32 %s202, 1
      %p206 = scmp.eq.s32.totalorder %s27, 1
      %p207 = scmp.ne.s32.totalorder %s202, %s204
      %p208 = scmp.eq.s32.totalorder %s27, 0
      %p209 = por %p207, %p208
      %p210 = scmp.ne.s32.totalorder %s202, %s204
      %p211 = scmp.eq.s32.totalorder %s32, 1
      %p212 = por %p210, %p211
      %p213 = scmp.ne.s32.totalorder %s204, %s205
      %p214 = scmp.eq.s32.totalorder %s32, 0
      %p215 = por %p213, %p214
      %p216 = scmp.ne.s32.totalorder %s204, %s205
      %p217 = scmp.eq.s32.totalorder %s33, 1
      %p218 = por %p216, %p217
      %p220 = scmp.ne.s32.totalorder %s205, %s219
      %p221 = scmp.eq.s32.totalorder %s33, 0
      %p222 = por %p220, %p221
      %s224 = sadd.s32 %s223, 1
      %p227 = scmp.eq.s32.totalorder %s27, 1
      %p228 = scmp.ne.s32.totalorder %s223, %s225
      %p229 = scmp.eq.s32.totalorder %s27, 0
      %p230 = por %p228, %p229
      %p231 = scmp.ne.s32.totalorder %s223, %s225
      %p232 = scmp.eq.s32.totalorder %s32, 1
      %p233 = por %p231, %p232
      %p234 = scmp.ne.s32.totalorder %s225, %s226
      %p235 = scmp.eq.s32.totalorder %s32, 0
      %p236 = por %p234, %p235
      %p237 = scmp.ne.s32.totalorder %s225, %s226
      %p238 = scmp.eq.s32.totalorder %s33, 1
      %p239 = por %p237, %p238
      %p241 = scmp.ne.s32.totalorder %s226, %s240
      %p242 = scmp.eq.s32.totalorder %s33, 0
      %p243 = por %p241, %p242
      %s245 = sadd.s32 %s244, 1
      %p248 = scmp.eq.s32.totalorder %s27, 1
      %p249 = scmp.ne.s32.totalorder %s244, %s246
      %p250 = scmp.eq.s32.totalorder %s27, 0
      %p251 = por %p249, %p250
      %p252 = scmp.ne.s32.totalorder %s244, %s246
      %p253 = scmp.eq.s32.totalorder %s32, 1
      %p254 = por %p252, %p253
      %p255 = scmp.ne.s32.totalorder %s246, %s247
      %p256 = scmp.eq.s32.totalorder %s32, 0
      %p257 = por %p255, %p256
      %p258 = scmp.ne.s32.totalorder %s246, %s247
      %p259 = scmp.eq.s32.totalorder %s33, 1
      %p260 = por %p258, %p259
      %p262 = scmp.ne.s32.totalorder %s247, %s261
      %p263 = scmp.eq.s32.totalorder %s33, 0
      %p264 = por %p262, %p263
      %s265 = ssub.s32 %s27, %s34
      %p266 = scmp.eq.s32.totalorder %s265, 0
      %s268 = sadd.s32 %s267, 1
      %s269 = scalar_select %p266, %s267, %s268
      %p272 = pneg %p266
      %p273 = scmp.eq.s32.totalorder %s27, 1
      %p274 = por %p272, %p273
      %p275 = scmp.ne.s32.totalorder %s267, %s270
      %p276 = scmp.eq.s32.totalorder %s27, 0
      %p277 = por %p275, %p276
      %p278 = scmp.ne.s32.totalorder %s267, %s270
      %p279 = scmp.eq.s32.totalorder %s32, 1
      %p280 = por %p278, %p279
      %p281 = scmp.ne.s32.totalorder %s270, %s271
      %p282 = scmp.eq.s32.totalorder %s32, 0
      %p283 = por %p281, %p282
      %p284 = scmp.ne.s32.totalorder %s270, %s271
      %p285 = scmp.eq.s32.totalorder %s33, 1
      %p286 = por %p284, %p285
      %p288 = scmp.ne.s32.totalorder %s271, %s287
      %p289 = scmp.eq.s32.totalorder %s33, 0
      %p290 = por %p288, %p289
      %p291 = scmp.le.s32.totalorder 1, %s27
      %p292 = scmp.lt.s32.totalorder %s27, 3
      %p293 = pnand %p291, %p292
      %p294 = pneg %p293
      // Predicated region
      $region9: #{tpu_custom_call.1} parent=5 // pred_check
        _
      $region10: #{tpu_custom_call.1} parent=5 // pred_check_branch
        %296 = sbr.rel (%p293) target = $region12
      $region11: #{tpu_custom_call.1} parent=5 // pred_region
        %s297 = ssub.s32 %s27, 1
        // Predicated region
        $region13: #{tpu_custom_call.1} parent=11 // pred_check
          %p298 = pneg %p152
        $region14: #{tpu_custom_call.1} parent=11 // pred_check_branch
          %300 = sbr.rel (%p298) target = $region16
        $region15: #{tpu_custom_call.1} parent=11 // pred_region
          %s302 = ssub.s32 512, 512
          %303 = vsyncadd [#allocation9], %s302
          %s304 = sshll.u32 [#allocation8], 4
          %s305 = int_to_ptr.vmem [resolvable:$true] %s304
          %310 = dma.hbm_to_vmem [thread:$0]  %s4, 512, %s305, [#allocation9], 128, 128, 8
        $region16: #{tpu_custom_call.1} parent=11 // pred_fallthru
          _
        // Predicated region
        $region17: #{tpu_custom_call.1} parent=11 // pred_check
          %p311 = pneg %p173
        $region18: #{tpu_custom_call.1} parent=11 // pred_check_branch
          %313 = sbr.rel (%p311) target = $region20
        $region19: #{tpu_custom_call.1} parent=11 // pred_region
          _
        $region20: #{tpu_custom_call.1} parent=11 // pred_fallthru
          _
        // Predicated region
        $region21: #{tpu_custom_call.1} parent=11 // pred_check
          %p314 = pneg %p194
        $region22: #{tpu_custom_call.1} parent=11 // pred_check_branch
          %316 = sbr.rel (%p314) target = $region24
        $region23: #{tpu_custom_call.1} parent=11 // pred_region
          %s318 = ssub.s32 512, 512
          %319 = vsyncadd [#allocation9], %s318
          %s320 = sshll.u32 [#allocation10], 4
          %s321 = int_to_ptr.vmem [resolvable:$true] %s320
          %326 = dma.hbm_to_vmem [thread:$0]  %s6, 512, %s321, [#allocation9], 128, 128, 8
        $region24: #{tpu_custom_call.1} parent=11 // pred_fallthru
          _
        // Predicated region
        $region25: #{tpu_custom_call.1} parent=11 // pred_check
          %p327 = pneg %p215
        $region26: #{tpu_custom_call.1} parent=11 // pred_check_branch
          %329 = sbr.rel (%p327) target = $region28
        $region27: #{tpu_custom_call.1} parent=11 // pred_region
          _
        $region28: #{tpu_custom_call.1} parent=11 // pred_fallthru
          _
        // Predicated region
        $region29: #{tpu_custom_call.1} parent=11 // pred_check
          %p330 = pneg %p236
        $region30: #{tpu_custom_call.1} parent=11 // pred_check_branch
          %332 = sbr.rel (%p330) target = $region32
        $region31: #{tpu_custom_call.1} parent=11 // pred_region
          %s334 = ssub.s32 512, 512
          %335 = vsyncadd [#allocation12], %s334
          %s336 = sshll.u32 [#allocation11], 4
          %s337 = int_to_ptr.vmem [resolvable:$true] %s336
          %342 = dma.hbm_to_vmem [thread:$0]  %s8, 512, %s337, [#allocation12], 128, 128, 8
        $region32: #{tpu_custom_call.1} parent=11 // pred_fallthru
          _
        // Predicated region
        $region33: #{tpu_custom_call.1} parent=11 // pred_check
          %p343 = pneg %p257
        $region34: #{tpu_custom_call.1} parent=11 // pred_check_branch
          %345 = sbr.rel (%p343) target = $region36
        $region35: #{tpu_custom_call.1} parent=11 // pred_region
          _
        $region36: #{tpu_custom_call.1} parent=11 // pred_fallthru
          _
      $region12: #{tpu_custom_call.1} parent=5 // pred_fallthru
        _
      %p346 = scmp.lt.s32.totalorder %s27, 2
      // Predicated region
      $region37: #{tpu_custom_call.1} parent=5 // pred_check
        %p347 = pneg %p346
      $region38: #{tpu_custom_call.1} parent=5 // pred_check_branch
        %349 = sbr.rel (%p347) target = $region40
      $region39: #{tpu_custom_call.1} parent=5 // pred_region
        // Predicated region
        $region41: #{tpu_custom_call.1} parent=39 // pred_check
          %p350 = pneg %p47
        $region42: #{tpu_custom_call.1} parent=39 // pred_check_branch
          %352 = sbr.rel (%p350) target = $region44
        $region43: #{tpu_custom_call.1} parent=39 // pred_region
          %s353 = sand.u32 %s37, 1
          %s354 = scalar_lea.sflag [#allocation3], %s353
          %s355 = sand.u32 %s37, 1
          %s356 = smul.addr %s355, 8
          %s357 = scalar_lea.vmem [#allocation2], %s356
          %s359 = ssub.s32 128, 128
          %360 = vsyncadd %s354, %s359
          %s361 = smul.addr %s27, 128
          %s362 = scalar_lea.hbm %s0, %s361
          %s364 = sshll.u32 %s357, 4
          %s365 = int_to_ptr.vmem [resolvable:$true] %s364
          %367 = dma.hbm_to_vmem [thread:$0]  %s362, 128, %s365, %s354
        $region44: #{tpu_custom_call.1} parent=39 // pred_fallthru
          _
        // Predicated region
        $region45: #{tpu_custom_call.1} parent=39 // pred_check
          %p368 = pneg %p73
        $region46: #{tpu_custom_call.1} parent=39 // pred_check_branch
          %370 = sbr.rel (%p368) target = $region48
        $region47: #{tpu_custom_call.1} parent=39 // pred_region
          %s371 = sand.u32 %s27, 1
          %s372 = scalar_lea.sflag [#allocation6], %s371
          %s373 = sand.u32 %s63, 1
          %s374 = smul.addr %s373, 8
          %s375 = scalar_lea.vmem [#allocation5], %s374
          %s377 = ssub.s32 128, 128
          %378 = vsyncadd %s372, %s377
          %s379 = smul.addr %s27, 128
          %s380 = scalar_lea.hbm %s1, %s379
          %s382 = sshll.u32 %s375, 4
          %s383 = int_to_ptr.vmem [resolvable:$true] %s382
          %385 = dma.hbm_to_vmem [thread:$0]  %s380, 128, %s383, %s372
        $region48: #{tpu_custom_call.1} parent=39 // pred_fallthru
          _
        // Predicated region
        $region49: #{tpu_custom_call.1} parent=39 // pred_check
          %p386 = pneg %p99
        $region50: #{tpu_custom_call.1} parent=39 // pred_check_branch
          %388 = sbr.rel (%p386) target = $region52
        $region51: #{tpu_custom_call.1} parent=39 // pred_region
          %s389 = sand.u32 %s27, 1
          %s390 = scalar_lea.sflag [#allocation6], %s389
          %s391 = sand.u32 %s89, 1
          %s392 = smul.addr %s391, 8
          %s393 = scalar_lea.vmem [#allocation7], %s392
          %s395 = ssub.s32 128, 128
          %396 = vsyncadd %s390, %s395
          %s397 = smul.addr %s27, 128
          %s398 = scalar_lea.hbm %s2, %s397
          %s400 = sshll.u32 %s393, 4
          %s401 = int_to_ptr.vmem [resolvable:$true] %s400
          %403 = dma.hbm_to_vmem [thread:$0]  %s398, 128, %s401, %s390
        $region52: #{tpu_custom_call.1} parent=39 // pred_fallthru
          _
        // Predicated region
        $region53: #{tpu_custom_call.1} parent=39 // pred_check
          %p404 = pneg %p125
        $region54: #{tpu_custom_call.1} parent=39 // pred_check_branch
          %406 = sbr.rel (%p404) target = $region56
        $region55: #{tpu_custom_call.1} parent=39 // pred_region
          %p407 = scmp.lt.s32.totalorder %s27, 1
          %s408 = scalar_select %p407, %s27, 1
          %s409 = scalar_lea.vmem %s3, %s408
        $region56: #{tpu_custom_call.1} parent=39 // pred_fallthru
          _
      $region40: #{tpu_custom_call.1} parent=5 // pred_fallthru
        _
      %p410 = scmp.le.s32.totalorder 1, %s27
      %p411 = scmp.lt.s32.totalorder %s27, 3
      %p412 = pnand %p410, %p411
      %p413 = pneg %p412
      // Predicated region
      $region57: #{tpu_custom_call.1} parent=5 // pred_check
        _
      $region58: #{tpu_custom_call.1} parent=5 // pred_check_branch
        %415 = sbr.rel (%p412) target = $region60
      $region59: #{tpu_custom_call.1} parent=5 // pred_region
        %s416 = ssub.s32 %s27, 1
        %s417 = sand.u32 %s40, 1
        %s418 = scalar_lea.sflag [#allocation3], %s417
        %s419 = sand.u32 %s40, 1
        %s420 = smul.addr %s419, 8
        %s421 = scalar_lea.vmem [#allocation2], %s420
        // Predicated region
        $region61: #{tpu_custom_call.1} parent=59 // pred_check
          %p422 = pneg %p53
        $region62: #{tpu_custom_call.1} parent=59 // pred_check_branch
          %424 = sbr.rel (%p422) target = $region64
        $region63: #{tpu_custom_call.1} parent=59 // pred_region
          %425 = dma.done %s418, 128
        $region64: #{tpu_custom_call.1} parent=59 // pred_fallthru
          _
        %s426 = sand.u32 %s32, 1
        %s427 = scalar_lea.sflag [#allocation6], %s426
        %s428 = sand.u32 %s66, 1
        %s429 = smul.addr %s428, 8
        %s430 = scalar_lea.vmem [#allocation5], %s429
        // Predicated region
        $region65: #{tpu_custom_call.1} parent=59 // pred_check
          %p431 = pneg %p79
        $region66: #{tpu_custom_call.1} parent=59 // pred_check_branch
          %433 = sbr.rel (%p431) target = $region68
        $region67: #{tpu_custom_call.1} parent=59 // pred_region
          %434 = dma.done %s427, 128
        $region68: #{tpu_custom_call.1} parent=59 // pred_fallthru
          _
        %s435 = sand.u32 %s32, 1
        %s436 = scalar_lea.sflag [#allocation6], %s435
        %s437 = sand.u32 %s92, 1
        %s438 = smul.addr %s437, 8
        %s439 = scalar_lea.vmem [#allocation7], %s438
        // Predicated region
        $region69: #{tpu_custom_call.1} parent=59 // pred_check
          %p440 = pneg %p105
        $region70: #{tpu_custom_call.1} parent=59 // pred_check_branch
          %442 = sbr.rel (%p440) target = $region72
        $region71: #{tpu_custom_call.1} parent=59 // pred_region
          %443 = dma.done %s436, 128
        $region72: #{tpu_custom_call.1} parent=59 // pred_fallthru
          _
        // Predicated region
        $region73: #{tpu_custom_call.1} parent=59 // pred_check
          %p444 = pneg %p152
        $region74: #{tpu_custom_call.1} parent=59 // pred_check_branch
          %446 = sbr.rel (%p444) target = $region76
        $region75: #{tpu_custom_call.1} parent=59 // pred_region
          %447 = dma.done [#allocation9], 512
        $region76: #{tpu_custom_call.1} parent=59 // pred_fallthru
          _
        // Predicated region
        $region77: #{tpu_custom_call.1} parent=59 // pred_check
          %p448 = pneg %p194
        $region78: #{tpu_custom_call.1} parent=59 // pred_check_branch
          %450 = sbr.rel (%p448) target = $region80
        $region79: #{tpu_custom_call.1} parent=59 // pred_region
          %451 = dma.done [#allocation9], 512
        $region80: #{tpu_custom_call.1} parent=59 // pred_fallthru
          _
        // Predicated region
        $region81: #{tpu_custom_call.1} parent=59 // pred_check
          %p452 = pneg %p236
        $region82: #{tpu_custom_call.1} parent=59 // pred_check_branch
          %454 = sbr.rel (%p452) target = $region84
        $region83: #{tpu_custom_call.1} parent=59 // pred_region
          %455 = dma.done [#allocation12], 512
        $region84: #{tpu_custom_call.1} parent=59 // pred_fallthru
          _
        %s456 = sand.u32 %s40, 1
        %s457 = scalar_lea.sflag [#allocation3], %s456
        %s458 = sand.u32 %s40, 1
        %s459 = smul.addr %s458, 8
        %s460 = scalar_lea.vmem [#allocation2], %s459
        %p461 = pneg %p53
        %p462 = pneg %p50
        %s463 = sand.u32 %s32, 1
        %s464 = scalar_lea.sflag [#allocation6], %s463
        %s465 = sand.u32 %s66, 1
        %s466 = smul.addr %s465, 8
        %s467 = scalar_lea.vmem [#allocation5], %s466
        %p468 = pneg %p79
        %p469 = pneg %p76
        %s470 = sand.u32 %s32, 1
        %s471 = scalar_lea.sflag [#allocation6], %s470
        %s472 = sand.u32 %s92, 1
        %s473 = smul.addr %s472, 8
        %s474 = scalar_lea.vmem [#allocation7], %s473
        %p475 = pneg %p105
        %p476 = pneg %p102
        %p477 = scmp.lt.s32.totalorder %s32, 1
        %s478 = scalar_select %p477, %s32, 1
        %s479 = scalar_lea.vmem %s3, %s478
        %p480 = pneg %p131
        %p481 = pneg %p128
        %p482 = pneg %p152
        %p483 = pneg %p149
        %p484 = pneg %p173
        %p485 = pneg %p170
        %p486 = pneg %p194
        %p487 = pneg %p191
        %p488 = pneg %p215
        %p489 = pneg %p212
        %p490 = pneg %p236
        %p491 = pneg %p233
        %p492 = pneg %p257
        %p493 = pneg %p254
        %p494 = pneg %p283
        %p495 = pneg %p280
        %s496 = sand.u32 %s270, 1
        %s497 = scalar_lea.sflag [#allocation4], %s496
        %s498 = sand.u32 %s270, 1
        %s499 = smul.addr %s498, 8
        %s500 = scalar_lea.vmem [#allocation13], %s499
        %p501 = scmp.lt.s32.totalorder %s32, 1
        %s502 = scalar_select %p501, %s32, 1
        %s503 = scalar_lea.vmem %s3, %s502
        %v504 = vld [vmem:[%s421] sm:$0xff]
        %v505 = vld [vmem:[#allocation8] sm:$0xff]
        %v506 = vld [vmem:[#allocation8 + $0x8] sm:$0xff]
        %v507 = vld [vmem:[#allocation8 + $0x10] sm:$0xff]
        %v508 = vld [vmem:[#allocation8 + $0x18] sm:$0xff]
        %v509 = vld [vmem:[%s5] sm:$0x1]
        %v511 = vlaneseq
        %v512 = vshrl.u32 %v511, 7
        %v513 = vsub.s32 0, %v512
        %v514 = vrot.slane %v509, %v513
        %vm516 = vcmask 261120
        %v518 = vsel %vm516, %v504, 0
        %520 = vmatprep.subr.mxu0 0.0
        %521 = vmatpush1.msra.mxu0 0.0
        %522 = vmatprep.subr.mxu0 0.0
        %523 = vmatpush1.msra.mxu0 0.0
        %524 = vmatprep.subr.mxu0 0.0
        %525 = vmatpush1.msra.mxu0 0.0
        %526 = vmatprep.subr.mxu0 0.0
        %527 = vmatpush1.msra.mxu0 0.0
        %528 = vmatprep.subr.mxu0 0.0
        %529 = vmatpush1.msra.mxu0 0.0
        %530 = vmatprep.subr.mxu0 0.0
        %531 = vmatpush1.msra.mxu0 0.0
        %532 = vmatprep.subr.mxu0 0.0
        %533 = vmatpush1.msra.mxu0 0.0
        %534 = vmatprep.subr.mxu0 0.0
        %535 = vmatpush1.msra.mxu0 0.0
        %536 = vmatprep.subr.mxu0 0.0
        %537 = vmatpush1.msra.mxu0 0.0
        %538 = vmatprep.subr.mxu0 0.0
        %539 = vmatpush1.msra.mxu0 0.0
        %540 = vmatprep.subr.mxu0 0.0
        %541 = vmatpush1.msra.mxu0 0.0
        %542 = vmatprep.subr.mxu0 0.0
        %543 = vmatpush1.msra.mxu0 0.0
        %544 = vmatprep.subr.mxu0 0.0
        %545 = vmatpush1.msra.mxu0 %v508
        %546 = vmatprep.subr.mxu0 0.0
        %547 = vmatpush1.msra.mxu0 %v507
        %548 = vmatprep.subr.mxu0 0.0
        %549 = vmatpush1.msra.mxu0 %v506
        %550 = vmatprep.subr.mxu0 0.0
        %551 = vmatpush1.msra.mxu0 %v505
        %552 = vmatprep.subr.mxu0 0.0
        %553 = vmatpush2.msra.mxu0 0.0
        %554 = vmatprep.subr.mxu0 0.0
        %555 = vmatpush2.msra.mxu0 0.0
        %556 = vmatprep.subr.mxu0 0.0
        %557 = vmatpush2.msra.mxu0 0.0
        %558 = vmatprep.subr.mxu0 0.0
        %559 = vmatpush2.msra.mxu0 0.0
        %560 = vmatprep.subr.mxu0 0.0
        %561 = vmatpush2.msra.mxu0 0.0
        %562 = vmatprep.subr.mxu0 0.0
        %563 = vmatpush2.msra.mxu0 0.0
        %564 = vmatprep.subr.mxu0 0.0
        %565 = vmatpush2.msra.mxu0 0.0
        %566 = vmatprep.subr.mxu0 0.0
        %567 = vmatpush2.msra.mxu0 0.0
        %568 = vmatprep.subr.mxu0 0.0
        %569 = vmatpush2.msra.mxu0 0.0
        %570 = vmatprep.subr.mxu0 0.0
        %571 = vmatpush2.msra.mxu0 0.0
        %572 = vmatprep.subr.mxu0 0.0
        %573 = vmatpush2.msra.mxu0 0.0
        %574 = vmatprep.subr.mxu0 0.0
        %575 = vmatpush2.msra.mxu0 0.0
        %576 = vmatprep.subr.mxu0 0.0
        %577 = vmatpush2.msra.mxu0 0.0
        %578 = vmatprep.subr.mxu0 0.0
        %579 = vmatpush2.msra.mxu0 0.0
        %580 = vmatprep.subr.mxu0 0.0
        %581 = vmatpush2.msra.mxu0 0.0
        %582 = vmatprep.subr.mxu0 0.0
        %583 = vmatpush2.msra.mxu0 0.0
        %584 = vmatprep.mubr.f32.mxu0 0.0
        %585 = vmatmul.mubr.f32.gmra.mxu0 %v518
        %v586 = vpop.f32.mrf.mxu0
        %v587 = vadd.f32 %v514, %v586
        %v588 = vpop.f32.mrf.mxu0
        %589 = vdwg.mxu0
        %v590 = vld [vmem:[%s430] sm:$0xff]
        %v591 = vld [vmem:[#allocation10] sm:$0xff]
        %v592 = vld [vmem:[#allocation10 + $0x8] sm:$0xff]
        %v593 = vld [vmem:[#allocation10 + $0x10] sm:$0xff]
        %v594 = vld [vmem:[#allocation10 + $0x18] sm:$0xff]
        %v595 = vld [vmem:[%s7] sm:$0x1]
        %v597 = vlaneseq
        %v598 = vshrl.u32 %v597, 7
        %v599 = vsub.s32 0, %v598
        %v600 = vrot.slane %v595, %v599
        %v603 = vsel %vm516, %v590, 0
        %605 = vmatprep.subr.mxu0 0.0
        %606 = vmatpush1.msra.mxu0 0.0
        %607 = vmatprep.subr.mxu0 0.0
        %608 = vmatpush1.msra.mxu0 0.0
        %609 = vmatprep.subr.mxu0 0.0
        %610 = vmatpush1.msra.mxu0 0.0
        %611 = vmatprep.subr.mxu0 0.0
        %612 = vmatpush1.msra.mxu0 0.0
        %613 = vmatprep.subr.mxu0 0.0
        %614 = vmatpush1.msra.mxu0 0.0
        %615 = vmatprep.subr.mxu0 0.0
        %616 = vmatpush1.msra.mxu0 0.0
        %617 = vmatprep.subr.mxu0 0.0
        %618 = vmatpush1.msra.mxu0 0.0
        %619 = vmatprep.subr.mxu0 0.0
        %620 = vmatpush1.msra.mxu0 0.0
        %621 = vmatprep.subr.mxu0 0.0
        %622 = vmatpush1.msra.mxu0 0.0
        %623 = vmatprep.subr.mxu0 0.0
        %624 = vmatpush1.msra.mxu0 0.0
        %625 = vmatprep.subr.mxu0 0.0
        %626 = vmatpush1.msra.mxu0 0.0
        %627 = vmatprep.subr.mxu0 0.0
        %628 = vmatpush1.msra.mxu0 0.0
        %629 = vmatprep.subr.mxu0 0.0
        %630 = vmatpush1.msra.mxu0 %v594
        %631 = vmatprep.subr.mxu0 0.0
        %632 = vmatpush1.msra.mxu0 %v593
        %633 = vmatprep.subr.mxu0 0.0
        %634 = vmatpush1.msra.mxu0 %v592
        %635 = vmatprep.subr.mxu0 0.0
        %636 = vmatpush1.msra.mxu0 %v591
        %637 = vmatprep.subr.mxu0 0.0
        %638 = vmatpush2.msra.mxu0 0.0
        %639 = vmatprep.subr.mxu0 0.0
        %640 = vmatpush2.msra.mxu0 0.0
        %641 = vmatprep.subr.mxu0 0.0
        %642 = vmatpush2.msra.mxu0 0.0
        %643 = vmatprep.subr.mxu0 0.0
        %644 = vmatpush2.msra.mxu0 0.0
        %645 = vmatprep.subr.mxu0 0.0
        %646 = vmatpush2.msra.mxu0 0.0
        %647 = vmatprep.subr.mxu0 0.0
        %648 = vmatpush2.msra.mxu0 0.0
        %649 = vmatprep.subr.mxu0 0.0
        %650 = vmatpush2.msra.mxu0 0.0
        %651 = vmatprep.subr.mxu0 0.0
        %652 = vmatpush2.msra.mxu0 0.0
        %653 = vmatprep.subr.mxu0 0.0
        %654 = vmatpush2.msra.mxu0 0.0
        %655 = vmatprep.subr.mxu0 0.0
        %656 = vmatpush2.msra.mxu0 0.0
        %657 = vmatprep.subr.mxu0 0.0
        %658 = vmatpush2.msra.mxu0 0.0
        %659 = vmatprep.subr.mxu0 0.0
        %660 = vmatpush2.msra.mxu0 0.0
        %661 = vmatprep.subr.mxu0 0.0
        %662 = vmatpush2.msra.mxu0 0.0
        %663 = vmatprep.subr.mxu0 0.0
        %664 = vmatpush2.msra.mxu0 0.0
        %665 = vmatprep.subr.mxu0 0.0
        %666 = vmatpush2.msra.mxu0 0.0
        %667 = vmatprep.subr.mxu0 0.0
        %668 = vmatpush2.msra.mxu0 0.0
        %669 = vmatprep.mubr.f32.mxu0 0.0
        %670 = vmatmul.mubr.f32.gmra.mxu0 %v603
        %v671 = vpop.f32.mrf.mxu0
        %v672 = vadd.f32 %v600, %v671
        %v673 = vpop.f32.mrf.mxu0
        %674 = vdwg.mxu0
        %v675 = vld [vmem:[%s439] sm:$0xff]
        %v676 = vmul.f32 %v675, 0.17677669
        %vm677 = vcmask 64512
        %v679 = vsel %vm677, %v676, 0
        %v682 = vsel %vm677, %v672, 0
        %684 = vmatprep.subr.mxu0 0.0
        %685 = vmatpush1.xpose.msra.mxu0 0.0
        %686 = vmatprep.subr.mxu0 0.0
        %687 = vmatpush1.xpose.msra.mxu0 0.0
        %688 = vmatprep.subr.mxu0 0.0
        %689 = vmatpush1.xpose.msra.mxu0 0.0
        %690 = vmatprep.subr.mxu0 0.0
        %691 = vmatpush1.xpose.msra.mxu0 0.0
        %692 = vmatprep.subr.mxu0 0.0
        %693 = vmatpush1.xpose.msra.mxu0 0.0
        %694 = vmatprep.subr.mxu0 0.0
        %695 = vmatpush1.xpose.msra.mxu0 0.0
        %696 = vmatprep.subr.mxu0 0.0
        %697 = vmatpush1.xpose.msra.mxu0 0.0
        %698 = vmatprep.subr.mxu0 0.0
        %699 = vmatpush1.xpose.msra.mxu0 0.0
        %700 = vmatprep.subr.mxu0 0.0
        %701 = vmatpush1.xpose.msra.mxu0 0.0
        %702 = vmatprep.subr.mxu0 0.0
        %703 = vmatpush1.xpose.msra.mxu0 0.0
        %704 = vmatprep.subr.mxu0 0.0
        %705 = vmatpush1.xpose.msra.mxu0 0.0
        %706 = vmatprep.subr.mxu0 0.0
        %707 = vmatpush1.xpose.msra.mxu0 0.0
        %708 = vmatprep.subr.mxu0 0.0
        %709 = vmatpush1.xpose.msra.mxu0 0.0
        %710 = vmatprep.subr.mxu0 0.0
        %711 = vmatpush1.xpose.msra.mxu0 0.0
        %712 = vmatprep.subr.mxu0 0.0
        %713 = vmatpush1.xpose.msra.mxu0 0.0
        %714 = vmatprep.subr.mxu0 0.0
        %715 = vmatpush1.xpose.msra.mxu0 %v682
        %716 = vmatprep.subr.mxu0 0.0
        %717 = vmatpush2.xpose.msra.mxu0 0.0
        %718 = vmatprep.subr.mxu0 0.0
        %719 = vmatpush2.xpose.msra.mxu0 0.0
        %720 = vmatprep.subr.mxu0 0.0
        %721 = vmatpush2.xpose.msra.mxu0 0.0
        %722 = vmatprep.subr.mxu0 0.0
        %723 = vmatpush2.xpose.msra.mxu0 0.0
        %724 = vmatprep.subr.mxu0 0.0
        %725 = vmatpush2.xpose.msra.mxu0 0.0
        %726 = vmatprep.subr.mxu0 0.0
        %727 = vmatpush2.xpose.msra.mxu0 0.0
        %728 = vmatprep.subr.mxu0 0.0
        %729 = vmatpush2.xpose.msra.mxu0 0.0
        %730 = vmatprep.subr.mxu0 0.0
        %731 = vmatpush2.xpose.msra.mxu0 0.0
        %732 = vmatprep.subr.mxu0 0.0
        %733 = vmatpush2.xpose.msra.mxu0 0.0
        %734 = vmatprep.subr.mxu0 0.0
        %735 = vmatpush2.xpose.msra.mxu0 0.0
        %736 = vmatprep.subr.mxu0 0.0
        %737 = vmatpush2.xpose.msra.mxu0 0.0
        %738 = vmatprep.subr.mxu0 0.0
        %739 = vmatpush2.xpose.msra.mxu0 0.0
        %740 = vmatprep.subr.mxu0 0.0
        %741 = vmatpush2.xpose.msra.mxu0 0.0
        %742 = vmatprep.subr.mxu0 0.0
        %743 = vmatpush2.xpose.msra.mxu0 0.0
        %744 = vmatprep.subr.mxu0 0.0
        %745 = vmatpush2.xpose.msra.mxu0 0.0
        %746 = vmatprep.subr.mxu0 0.0
        %747 = vmatpush2.xpose.msra.mxu0 0.0
        %748 = vmatprep.mubr.f32.mxu0 0.0
        %749 = vmatmul.mubr.f32.gmra.mxu0 %v679
        %v750 = vpop.f32.mrf.mxu0
        %v751 = vadd.f32 0.0, %v750
        %v752 = vpop.f32.mrf.mxu0
        %753 = vdwg.mxu0
        %754 = vrot.lane.b32.xlu0 %v676, 120
        %v755 = vpop.permute.xlu0 %754
        %756 = vrot.lane.b32.xlu0 %v672, 120
        %v757 = vpop.permute.xlu0 %756
        %v758 = vsel %vm677, %v755, 0
        %v760 = vsel %vm677, %v757, 0
        %762 = vmatprep.subr.mxu0 0.0
        %763 = vmatpush1.xpose.msra.mxu0 0.0
        %764 = vmatprep.subr.mxu0 0.0
        %765 = vmatpush1.xpose.msra.mxu0 0.0
        %766 = vmatprep.subr.mxu0 0.0
        %767 = vmatpush1.xpose.msra.mxu0 0.0
        %768 = vmatprep.subr.mxu0 0.0
        %769 = vmatpush1.xpose.msra.mxu0 0.0
        %770 = vmatprep.subr.mxu0 0.0
        %771 = vmatpush1.xpose.msra.mxu0 0.0
        %772 = vmatprep.subr.mxu0 0.0
        %773 = vmatpush1.xpose.msra.mxu0 0.0
        %774 = vmatprep.subr.mxu0 0.0
        %775 = vmatpush1.xpose.msra.mxu0 0.0
        %776 = vmatprep.subr.mxu0 0.0
        %777 = vmatpush1.xpose.msra.mxu0 0.0
        %778 = vmatprep.subr.mxu0 0.0
        %779 = vmatpush1.xpose.msra.mxu0 0.0
        %780 = vmatprep.subr.mxu0 0.0
        %781 = vmatpush1.xpose.msra.mxu0 0.0
        %782 = vmatprep.subr.mxu0 0.0
        %783 = vmatpush1.xpose.msra.mxu0 0.0
        %784 = vmatprep.subr.mxu0 0.0
        %785 = vmatpush1.xpose.msra.mxu0 0.0
        %786 = vmatprep.subr.mxu0 0.0
        %787 = vmatpush1.xpose.msra.mxu0 0.0
        %788 = vmatprep.subr.mxu0 0.0
        %789 = vmatpush1.xpose.msra.mxu0 0.0
        %790 = vmatprep.subr.mxu0 0.0
        %791 = vmatpush1.xpose.msra.mxu0 0.0
        %792 = vmatprep.subr.mxu0 0.0
        %793 = vmatpush1.xpose.msra.mxu0 %v760
        %794 = vmatprep.subr.mxu0 0.0
        %795 = vmatpush2.xpose.msra.mxu0 0.0
        %796 = vmatprep.subr.mxu0 0.0
        %797 = vmatpush2.xpose.msra.mxu0 0.0
        %798 = vmatprep.subr.mxu0 0.0
        %799 = vmatpush2.xpose.msra.mxu0 0.0
        %800 = vmatprep.subr.mxu0 0.0
        %801 = vmatpush2.xpose.msra.mxu0 0.0
        %802 = vmatprep.subr.mxu0 0.0
        %803 = vmatpush2.xpose.msra.mxu0 0.0
        %804 = vmatprep.subr.mxu0 0.0
        %805 = vmatpush2.xpose.msra.mxu0 0.0
        %806 = vmatprep.subr.mxu0 0.0
        %807 = vmatpush2.xpose.msra.mxu0 0.0
        %808 = vmatprep.subr.mxu0 0.0
        %809 = vmatpush2.xpose.msra.mxu0 0.0
        %810 = vmatprep.subr.mxu0 0.0
        %811 = vmatpush2.xpose.msra.mxu0 0.0
        %812 = vmatprep.subr.mxu0 0.0
        %813 = vmatpush2.xpose.msra.mxu0 0.0
        %814 = vmatprep.subr.mxu0 0.0
        %815 = vmatpush2.xpose.msra.mxu0 0.0
        %816 = vmatprep.subr.mxu0 0.0
        %817 = vmatpush2.xpose.msra.mxu0 0.0
        %818 = vmatprep.subr.mxu0 0.0
        %819 = vmatpush2.xpose.msra.mxu0 0.0
        %820 = vmatprep.subr.mxu0 0.0
        %821 = vmatpush2.xpose.msra.mxu0 0.0
        %822 = vmatprep.subr.mxu0 0.0
        %823 = vmatpush2.xpose.msra.mxu0 0.0
        %824 = vmatprep.subr.mxu0 0.0
        %825 = vmatpush2.xpose.msra.mxu0 0.0
        %826 = vmatprep.mubr.f32.mxu0 0.0
        %827 = vmatmul.mubr.f32.gmra.mxu0 %v758
        %v828 = vpop.f32.mrf.mxu0
        %v829 = vadd.f32 0.0, %v828
        %v830 = vpop.f32.mrf.mxu0
        %831 = vdwg.mxu0
        %832 = vrot.lane.b32.xlu0 %v676, 112
        %v833 = vpop.permute.xlu0 %832
        %834 = vrot.lane.b32.xlu0 %v672, 112
        %v835 = vpop.permute.xlu0 %834
        %v836 = vsel %vm677, %v833, 0
        %v838 = vsel %vm677, %v835, 0
        %840 = vmatprep.subr.mxu0 0.0
        %841 = vmatpush1.xpose.msra.mxu0 0.0
        %842 = vmatprep.subr.mxu0 0.0
        %843 = vmatpush1.xpose.msra.mxu0 0.0
        %844 = vmatprep.subr.mxu0 0.0
        %845 = vmatpush1.xpose.msra.mxu0 0.0
        %846 = vmatprep.subr.mxu0 0.0
        %847 = vmatpush1.xpose.msra.mxu0 0.0
        %848 = vmatprep.subr.mxu0 0.0
        %849 = vmatpush1.xpose.msra.mxu0 0.0
        %850 = vmatprep.subr.mxu0 0.0
        %851 = vmatpush1.xpose.msra.mxu0 0.0
        %852 = vmatprep.subr.mxu0 0.0
        %853 = vmatpush1.xpose.msra.mxu0 0.0
        %854 = vmatprep.subr.mxu0 0.0
        %855 = vmatpush1.xpose.msra.mxu0 0.0
        %856 = vmatprep.subr.mxu0 0.0
        %857 = vmatpush1.xpose.msra.mxu0 0.0
        %858 = vmatprep.subr.mxu0 0.0
        %859 = vmatpush1.xpose.msra.mxu0 0.0
        %860 = vmatprep.subr.mxu0 0.0
        %861 = vmatpush1.xpose.msra.mxu0 0.0
        %862 = vmatprep.subr.mxu0 0.0
        %863 = vmatpush1.xpose.msra.mxu0 0.0
        %864 = vmatprep.subr.mxu0 0.0
        %865 = vmatpush1.xpose.msra.mxu0 0.0
        %866 = vmatprep.subr.mxu0 0.0
        %867 = vmatpush1.xpose.msra.mxu0 0.0
        %868 = vmatprep.subr.mxu0 0.0
        %869 = vmatpush1.xpose.msra.mxu0 0.0
        %870 = vmatprep.subr.mxu0 0.0
        %871 = vmatpush1.xpose.msra.mxu0 %v838
        %872 = vmatprep.subr.mxu0 0.0
        %873 = vmatpush2.xpose.msra.mxu0 0.0
        %874 = vmatprep.subr.mxu0 0.0
        %875 = vmatpush2.xpose.msra.mxu0 0.0
        %876 = vmatprep.subr.mxu0 0.0
        %877 = vmatpush2.xpose.msra.mxu0 0.0
        %878 = vmatprep.subr.mxu0 0.0
        %879 = vmatpush2.xpose.msra.mxu0 0.0
        %880 = vmatprep.subr.mxu0 0.0
        %881 = vmatpush2.xpose.msra.mxu0 0.0
        %882 = vmatprep.subr.mxu0 0.0
        %883 = vmatpush2.xpose.msra.mxu0 0.0
        %884 = vmatprep.subr.mxu0 0.0
        %885 = vmatpush2.xpose.msra.mxu0 0.0
        %886 = vmatprep.subr.mxu0 0.0
        %887 = vmatpush2.xpose.msra.mxu0 0.0
        %888 = vmatprep.subr.mxu0 0.0
        %889 = vmatpush2.xpose.msra.mxu0 0.0
        %890 = vmatprep.subr.mxu0 0.0
        %891 = vmatpush2.xpose.msra.mxu0 0.0
        %892 = vmatprep.subr.mxu0 0.0
        %893 = vmatpush2.xpose.msra.mxu0 0.0
        %894 = vmatprep.subr.mxu0 0.0
        %895 = vmatpush2.xpose.msra.mxu0 0.0
        %896 = vmatprep.subr.mxu0 0.0
        %897 = vmatpush2.xpose.msra.mxu0 0.0
        %898 = vmatprep.subr.mxu0 0.0
        %899 = vmatpush2.xpose.msra.mxu0 0.0
        %900 = vmatprep.subr.mxu0 0.0
        %901 = vmatpush2.xpose.msra.mxu0 0.0
        %902 = vmatprep.subr.mxu0 0.0
        %903 = vmatpush2.xpose.msra.mxu0 0.0
        %904 = vmatprep.mubr.f32.mxu0 0.0
        %905 = vmatmul.mubr.f32.gmra.mxu0 %v836
        %v906 = vpop.f32.mrf.mxu0
        %v907 = vadd.f32 0.0, %v906
        %v908 = vpop.f32.mrf.mxu0
        %909 = vdwg.mxu0
        %910 = vrot.lane.b32.xlu0 %v676, 104
        %v911 = vpop.permute.xlu0 %910
        %912 = vrot.lane.b32.xlu0 %v672, 104
        %v913 = vpop.permute.xlu0 %912
        %v914 = vsel %vm677, %v911, 0
        %v916 = vsel %vm677, %v913, 0
        %918 = vmatprep.subr.mxu0 0.0
        %919 = vmatpush1.xpose.msra.mxu0 0.0
        %920 = vmatprep.subr.mxu0 0.0
        %921 = vmatpush1.xpose.msra.mxu0 0.0
        %922 = vmatprep.subr.mxu0 0.0
        %923 = vmatpush1.xpose.msra.mxu0 0.0
        %924 = vmatprep.subr.mxu0 0.0
        %925 = vmatpush1.xpose.msra.mxu0 0.0
        %926 = vmatprep.subr.mxu0 0.0
        %927 = vmatpush1.xpose.msra.mxu0 0.0
        %928 = vmatprep.subr.mxu0 0.0
        %929 = vmatpush1.xpose.msra.mxu0 0.0
        %930 = vmatprep.subr.mxu0 0.0
        %931 = vmatpush1.xpose.msra.mxu0 0.0
        %932 = vmatprep.subr.mxu0 0.0
        %933 = vmatpush1.xpose.msra.mxu0 0.0
        %934 = vmatprep.subr.mxu0 0.0
        %935 = vmatpush1.xpose.msra.mxu0 0.0
        %936 = vmatprep.subr.mxu0 0.0
        %937 = vmatpush1.xpose.msra.mxu0 0.0
        %938 = vmatprep.subr.mxu0 0.0
        %939 = vmatpush1.xpose.msra.mxu0 0.0
        %940 = vmatprep.subr.mxu0 0.0
        %941 = vmatpush1.xpose.msra.mxu0 0.0
        %942 = vmatprep.subr.mxu0 0.0
        %943 = vmatpush1.xpose.msra.mxu0 0.0
        %944 = vmatprep.subr.mxu0 0.0
        %945 = vmatpush1.xpose.msra.mxu0 0.0
        %946 = vmatprep.subr.mxu0 0.0
        %947 = vmatpush1.xpose.msra.mxu0 0.0
        %948 = vmatprep.subr.mxu0 0.0
        %949 = vmatpush1.xpose.msra.mxu0 %v916
        %950 = vmatprep.subr.mxu0 0.0
        %951 = vmatpush2.xpose.msra.mxu0 0.0
        %952 = vmatprep.subr.mxu0 0.0
        %953 = vmatpush2.xpose.msra.mxu0 0.0
        %954 = vmatprep.subr.mxu0 0.0
        %955 = vmatpush2.xpose.msra.mxu0 0.0
        %956 = vmatprep.subr.mxu0 0.0
        %957 = vmatpush2.xpose.msra.mxu0 0.0
        %958 = vmatprep.subr.mxu0 0.0
        %959 = vmatpush2.xpose.msra.mxu0 0.0
        %960 = vmatprep.subr.mxu0 0.0
        %961 = vmatpush2.xpose.msra.mxu0 0.0
        %962 = vmatprep.subr.mxu0 0.0
        %963 = vmatpush2.xpose.msra.mxu0 0.0
        %964 = vmatprep.subr.mxu0 0.0
        %965 = vmatpush2.xpose.msra.mxu0 0.0
        %966 = vmatprep.subr.mxu0 0.0
        %967 = vmatpush2.xpose.msra.mxu0 0.0
        %968 = vmatprep.subr.mxu0 0.0
        %969 = vmatpush2.xpose.msra.mxu0 0.0
        %970 = vmatprep.subr.mxu0 0.0
        %971 = vmatpush2.xpose.msra.mxu0 0.0
        %972 = vmatprep.subr.mxu0 0.0
        %973 = vmatpush2.xpose.msra.mxu0 0.0
        %974 = vmatprep.subr.mxu0 0.0
        %975 = vmatpush2.xpose.msra.mxu0 0.0
        %976 = vmatprep.subr.mxu0 0.0
        %977 = vmatpush2.xpose.msra.mxu0 0.0
        %978 = vmatprep.subr.mxu0 0.0
        %979 = vmatpush2.xpose.msra.mxu0 0.0
        %980 = vmatprep.subr.mxu0 0.0
        %981 = vmatpush2.xpose.msra.mxu0 0.0
        %982 = vmatprep.mubr.f32.mxu0 0.0
        %983 = vmatmul.mubr.f32.gmra.mxu0 %v914
        %v984 = vpop.f32.mrf.mxu0
        %v985 = vadd.f32 0.0, %v984
        %v986 = vpop.f32.mrf.mxu0
        %987 = vdwg.mxu0
        %v988 = vld [vmem:[%s503] sm:$0x1]
        %vm989 = vcmp.eq.f32.partialorder %v988, 0.0
        %v990 = vsel %vm989, 1, 0
        %v991 = vlaneseq
        %v992 = vshrl.u32 %v991, 7
        %v993 = vsub.s32 0, %v992
        %v994 = vrot.slane %v990, %v993
        %vm995 = vcmp.eq.s32.totalorder %v994, 1
        %v996 = vsel %vm995, -1e+20, %v751
        %v997 = vsel %vm995, -1e+20, %v829
        %v998 = vsel %vm995, -1e+20, %v907
        %v999 = vsel %vm995, -1e+20, %v985
        %v1000 = vsel %vm677, %v996, -inf
        %1001 = vmax.xlane.f32.xlu0 %v1000
        %v1002 = vpop.xlane.xlu0 %1001
        %v1003 = vsel %vm677, %v997, -inf
        %1004 = vmax.xlane.f32.xlu0 %v1003
        %v1005 = vpop.xlane.xlu0 %1004
        %v1006 = vsel %vm677, %v998, -inf
        %1007 = vmax.xlane.f32.xlu0 %v1006
        %v1008 = vpop.xlane.xlu0 %1007
        %v1009 = vsel %vm677, %v999, -inf
        %1010 = vmax.xlane.f32.xlu0 %v1009
        %v1011 = vpop.xlane.xlu0 %1010
        %v1012 = vsub.f32 %v996, %v1002
        %v1013 = vsub.f32 %v997, %v1005
        %v1014 = vsub.f32 %v998, %v1008
        %v1015 = vsub.f32 %v999, %v1011
        %v1016 = vmul.f32 %v1012, 1.442695
        %v1017 = vpow.pop %v1016
        %v1018 = vmul.f32 %v1013, 1.442695
        %v1019 = vpow.pop %v1018
        %v1020 = vmul.f32 %v1014, 1.442695
        %v1021 = vpow.pop %v1020
        %v1022 = vmul.f32 %v1015, 1.442695
        %v1023 = vpow.pop %v1022
        %v1024 = vsel %vm677, %v1017, 0.0
        %1025 = vadd.xlane.f32.xlu0 %v1024
        %v1026 = vpop.xlane.xlu0 %1025
        %v1027 = vsel %vm677, %v1019, 0.0
        %1028 = vadd.xlane.f32.xlu0 %v1027
        %v1029 = vpop.xlane.xlu0 %1028
        %v1030 = vsel %vm677, %v1021, 0.0
        %1031 = vadd.xlane.f32.xlu0 %v1030
        %v1032 = vpop.xlane.xlu0 %1031
        %v1033 = vsel %vm677, %v1023, 0.0
        %1034 = vadd.xlane.f32.xlu0 %v1033
        %v1035 = vpop.xlane.xlu0 %1034
        %v1036 = vrcp.pop %v1026
        %v1037 = vrcp.pop %v1029
        %v1038 = vrcp.pop %v1032
        %v1039 = vrcp.pop %v1035
        %v1040 = vmul.f32 %v1017, %v1036
        %v1041 = vmul.f32 %v1019, %v1037
        %v1042 = vmul.f32 %v1021, %v1038
        %v1043 = vmul.f32 %v1023, %v1039
        %v1045 = vsel %vm677, %v1040, 0
        %1047 = vmatprep.subr.mxu0 0.0
        %1048 = vmatpush1.msra.mxu0 0.0
        %1049 = vmatprep.subr.mxu0 0.0
        %1050 = vmatpush1.msra.mxu0 0.0
        %1051 = vmatprep.subr.mxu0 0.0
        %1052 = vmatpush1.msra.mxu0 0.0
        %1053 = vmatprep.subr.mxu0 0.0
        %1054 = vmatpush1.msra.mxu0 0.0
        %1055 = vmatprep.subr.mxu0 0.0
        %1056 = vmatpush1.msra.mxu0 0.0
        %1057 = vmatprep.subr.mxu0 0.0
        %1058 = vmatpush1.msra.mxu0 0.0
        %1059 = vmatprep.subr.mxu0 0.0
        %1060 = vmatpush1.msra.mxu0 0.0
        %1061 = vmatprep.subr.mxu0 0.0
        %1062 = vmatpush1.msra.mxu0 0.0
        %1063 = vmatprep.subr.mxu0 0.0
        %1064 = vmatpush1.msra.mxu0 0.0
        %1065 = vmatprep.subr.mxu0 0.0
        %1066 = vmatpush1.msra.mxu0 0.0
        %1067 = vmatprep.subr.mxu0 0.0
        %1068 = vmatpush1.msra.mxu0 0.0
        %1069 = vmatprep.subr.mxu0 0.0
        %1070 = vmatpush1.msra.mxu0 0.0
        %1071 = vmatprep.subr.mxu0 0.0
        %1072 = vmatpush1.msra.mxu0 0.0
        %1073 = vmatprep.subr.mxu0 0.0
        %1074 = vmatpush1.msra.mxu0 0.0
        %1075 = vmatprep.subr.mxu0 0.0
        %1076 = vmatpush1.msra.mxu0 0.0
        %1077 = vmatprep.subr.mxu0 0.0
        %1078 = vmatpush1.msra.mxu0 %v587
        %1079 = vmatprep.subr.mxu0 0.0
        %1080 = vmatpush2.msra.mxu0 0.0
        %1081 = vmatprep.subr.mxu0 0.0
        %1082 = vmatpush2.msra.mxu0 0.0
        %1083 = vmatprep.subr.mxu0 0.0
        %1084 = vmatpush2.msra.mxu0 0.0
        %1085 = vmatprep.subr.mxu0 0.0
        %1086 = vmatpush2.msra.mxu0 0.0
        %1087 = vmatprep.subr.mxu0 0.0
        %1088 = vmatpush2.msra.mxu0 0.0
        %1089 = vmatprep.subr.mxu0 0.0
        %1090 = vmatpush2.msra.mxu0 0.0
        %1091 = vmatprep.subr.mxu0 0.0
        %1092 = vmatpush2.msra.mxu0 0.0
        %1093 = vmatprep.subr.mxu0 0.0
        %1094 = vmatpush2.msra.mxu0 0.0
        %1095 = vmatprep.subr.mxu0 0.0
        %1096 = vmatpush2.msra.mxu0 0.0
        %1097 = vmatprep.subr.mxu0 0.0
        %1098 = vmatpush2.msra.mxu0 0.0
        %1099 = vmatprep.subr.mxu0 0.0
        %1100 = vmatpush2.msra.mxu0 0.0
        %1101 = vmatprep.subr.mxu0 0.0
        %1102 = vmatpush2.msra.mxu0 0.0
        %1103 = vmatprep.subr.mxu0 0.0
        %1104 = vmatpush2.msra.mxu0 0.0
        %1105 = vmatprep.subr.mxu0 0.0
        %1106 = vmatpush2.msra.mxu0 0.0
        %1107 = vmatprep.subr.mxu0 0.0
        %1108 = vmatpush2.msra.mxu0 0.0
        %1109 = vmatprep.subr.mxu0 0.0
        %1110 = vmatpush2.msra.mxu0 0.0
        %1111 = vmatprep.mubr.f32.mxu0 0.0
        %1112 = vmatmul.mubr.f32.gmra.mxu0 %v1045
        %v1113 = vpop.f32.mrf.mxu0
        %v1114 = vadd.f32 0.0, %v1113
        %v1115 = vpop.f32.mrf.mxu0
        %1116 = vdwg.mxu0
        %1118 = vrot.lane.b32.xlu0 %v587, 120
        %v1119 = vpop.permute.xlu0 %1118
        %v1122 = vsel %vm677, %v1041, 0
        %1124 = vmatprep.subr.mxu0 0.0
        %1125 = vmatpush1.msra.mxu0 0.0
        %1126 = vmatprep.subr.mxu0 0.0
        %1127 = vmatpush1.msra.mxu0 0.0
        %1128 = vmatprep.subr.mxu0 0.0
        %1129 = vmatpush1.msra.mxu0 0.0
        %1130 = vmatprep.subr.mxu0 0.0
        %1131 = vmatpush1.msra.mxu0 0.0
        %1132 = vmatprep.subr.mxu0 0.0
        %1133 = vmatpush1.msra.mxu0 0.0
        %1134 = vmatprep.subr.mxu0 0.0
        %1135 = vmatpush1.msra.mxu0 0.0
        %1136 = vmatprep.subr.mxu0 0.0
        %1137 = vmatpush1.msra.mxu0 0.0
        %1138 = vmatprep.subr.mxu0 0.0
        %1139 = vmatpush1.msra.mxu0 0.0
        %1140 = vmatprep.subr.mxu0 0.0
        %1141 = vmatpush1.msra.mxu0 0.0
        %1142 = vmatprep.subr.mxu0 0.0
        %1143 = vmatpush1.msra.mxu0 0.0
        %1144 = vmatprep.subr.mxu0 0.0
        %1145 = vmatpush1.msra.mxu0 0.0
        %1146 = vmatprep.subr.mxu0 0.0
        %1147 = vmatpush1.msra.mxu0 0.0
        %1148 = vmatprep.subr.mxu0 0.0
        %1149 = vmatpush1.msra.mxu0 0.0
        %1150 = vmatprep.subr.mxu0 0.0
        %1151 = vmatpush1.msra.mxu0 0.0
        %1152 = vmatprep.subr.mxu0 0.0
        %1153 = vmatpush1.msra.mxu0 0.0
        %1154 = vmatprep.subr.mxu0 0.0
        %1155 = vmatpush1.msra.mxu0 %v1119
        %1156 = vmatprep.subr.mxu0 0.0
        %1157 = vmatpush2.msra.mxu0 0.0
        %1158 = vmatprep.subr.mxu0 0.0
        %1159 = vmatpush2.msra.mxu0 0.0
        %1160 = vmatprep.subr.mxu0 0.0
        %1161 = vmatpush2.msra.mxu0 0.0
        %1162 = vmatprep.subr.mxu0 0.0
        %1163 = vmatpush2.msra.mxu0 0.0
        %1164 = vmatprep.subr.mxu0 0.0
        %1165 = vmatpush2.msra.mxu0 0.0
        %1166 = vmatprep.subr.mxu0 0.0
        %1167 = vmatpush2.msra.mxu0 0.0
        %1168 = vmatprep.subr.mxu0 0.0
        %1169 = vmatpush2.msra.mxu0 0.0
        %1170 = vmatprep.subr.mxu0 0.0
        %1171 = vmatpush2.msra.mxu0 0.0
        %1172 = vmatprep.subr.mxu0 0.0
        %1173 = vmatpush2.msra.mxu0 0.0
        %1174 = vmatprep.subr.mxu0 0.0
        %1175 = vmatpush2.msra.mxu0 0.0
        %1176 = vmatprep.subr.mxu0 0.0
        %1177 = vmatpush2.msra.mxu0 0.0
        %1178 = vmatprep.subr.mxu0 0.0
        %1179 = vmatpush2.msra.mxu0 0.0
        %1180 = vmatprep.subr.mxu0 0.0
        %1181 = vmatpush2.msra.mxu0 0.0
        %1182 = vmatprep.subr.mxu0 0.0
        %1183 = vmatpush2.msra.mxu0 0.0
        %1184 = vmatprep.subr.mxu0 0.0
        %1185 = vmatpush2.msra.mxu0 0.0
        %1186 = vmatprep.subr.mxu0 0.0
        %1187 = vmatpush2.msra.mxu0 0.0
        %1188 = vmatprep.mubr.f32.mxu0 0.0
        %1189 = vmatmul.mubr.f32.gmra.mxu0 %v1122
        %v1190 = vpop.f32.mrf.mxu0
        %v1191 = vadd.f32 0.0, %v1190
        %v1192 = vpop.f32.mrf.mxu0
        %1193 = vdwg.mxu0
        %1194 = vrot.lane.b32.xlu0 %v587, 112
        %v1195 = vpop.permute.xlu0 %1194
        %v1198 = vsel %vm677, %v1042, 0
        %1200 = vmatprep.subr.mxu0 0.0
        %1201 = vmatpush1.msra.mxu0 0.0
        %1202 = vmatprep.subr.mxu0 0.0
        %1203 = vmatpush1.msra.mxu0 0.0
        %1204 = vmatprep.subr.mxu0 0.0
        %1205 = vmatpush1.msra.mxu0 0.0
        %1206 = vmatprep.subr.mxu0 0.0
        %1207 = vmatpush1.msra.mxu0 0.0
        %1208 = vmatprep.subr.mxu0 0.0
        %1209 = vmatpush1.msra.mxu0 0.0
        %1210 = vmatprep.subr.mxu0 0.0
        %1211 = vmatpush1.msra.mxu0 0.0
        %1212 = vmatprep.subr.mxu0 0.0
        %1213 = vmatpush1.msra.mxu0 0.0
        %1214 = vmatprep.subr.mxu0 0.0
        %1215 = vmatpush1.msra.mxu0 0.0
        %1216 = vmatprep.subr.mxu0 0.0
        %1217 = vmatpush1.msra.mxu0 0.0
        %1218 = vmatprep.subr.mxu0 0.0
        %1219 = vmatpush1.msra.mxu0 0.0
        %1220 = vmatprep.subr.mxu0 0.0
        %1221 = vmatpush1.msra.mxu0 0.0
        %1222 = vmatprep.subr.mxu0 0.0
        %1223 = vmatpush1.msra.mxu0 0.0
        %1224 = vmatprep.subr.mxu0 0.0
        %1225 = vmatpush1.msra.mxu0 0.0
        %1226 = vmatprep.subr.mxu0 0.0
        %1227 = vmatpush1.msra.mxu0 0.0
        %1228 = vmatprep.subr.mxu0 0.0
        %1229 = vmatpush1.msra.mxu0 0.0
        %1230 = vmatprep.subr.mxu0 0.0
        %1231 = vmatpush1.msra.mxu0 %v1195
        %1232 = vmatprep.subr.mxu0 0.0
        %1233 = vmatpush2.msra.mxu0 0.0
        %1234 = vmatprep.subr.mxu0 0.0
        %1235 = vmatpush2.msra.mxu0 0.0
        %1236 = vmatprep.subr.mxu0 0.0
        %1237 = vmatpush2.msra.mxu0 0.0
        %1238 = vmatprep.subr.mxu0 0.0
        %1239 = vmatpush2.msra.mxu0 0.0
        %1240 = vmatprep.subr.mxu0 0.0
        %1241 = vmatpush2.msra.mxu0 0.0
        %1242 = vmatprep.subr.mxu0 0.0
        %1243 = vmatpush2.msra.mxu0 0.0
        %1244 = vmatprep.subr.mxu0 0.0
        %1245 = vmatpush2.msra.mxu0 0.0
        %1246 = vmatprep.subr.mxu0 0.0
        %1247 = vmatpush2.msra.mxu0 0.0
        %1248 = vmatprep.subr.mxu0 0.0
        %1249 = vmatpush2.msra.mxu0 0.0
        %1250 = vmatprep.subr.mxu0 0.0
        %1251 = vmatpush2.msra.mxu0 0.0
        %1252 = vmatprep.subr.mxu0 0.0
        %1253 = vmatpush2.msra.mxu0 0.0
        %1254 = vmatprep.subr.mxu0 0.0
        %1255 = vmatpush2.msra.mxu0 0.0
        %1256 = vmatprep.subr.mxu0 0.0
        %1257 = vmatpush2.msra.mxu0 0.0
        %1258 = vmatprep.subr.mxu0 0.0
        %1259 = vmatpush2.msra.mxu0 0.0
        %1260 = vmatprep.subr.mxu0 0.0
        %1261 = vmatpush2.msra.mxu0 0.0
        %1262 = vmatprep.subr.mxu0 0.0
        %1263 = vmatpush2.msra.mxu0 0.0
        %1264 = vmatprep.mubr.f32.mxu0 0.0
        %1265 = vmatmul.mubr.f32.gmra.mxu0 %v1198
        %v1266 = vpop.f32.mrf.mxu0
        %v1267 = vadd.f32 0.0, %v1266
        %v1268 = vpop.f32.mrf.mxu0
        %1269 = vdwg.mxu0
        %1270 = vrot.lane.b32.xlu0 %v587, 104
        %v1271 = vpop.permute.xlu0 %1270
        %v1274 = vsel %vm677, %v1043, 0
        %1276 = vmatprep.subr.mxu0 0.0
        %1277 = vmatpush1.msra.mxu0 0.0
        %1278 = vmatprep.subr.mxu0 0.0
        %1279 = vmatpush1.msra.mxu0 0.0
        %1280 = vmatprep.subr.mxu0 0.0
        %1281 = vmatpush1.msra.mxu0 0.0
        %1282 = vmatprep.subr.mxu0 0.0
        %1283 = vmatpush1.msra.mxu0 0.0
        %1284 = vmatprep.subr.mxu0 0.0
        %1285 = vmatpush1.msra.mxu0 0.0
        %1286 = vmatprep.subr.mxu0 0.0
        %1287 = vmatpush1.msra.mxu0 0.0
        %1288 = vmatprep.subr.mxu0 0.0
        %1289 = vmatpush1.msra.mxu0 0.0
        %1290 = vmatprep.subr.mxu0 0.0
        %1291 = vmatpush1.msra.mxu0 0.0
        %1292 = vmatprep.subr.mxu0 0.0
        %1293 = vmatpush1.msra.mxu0 0.0
        %1294 = vmatprep.subr.mxu0 0.0
        %1295 = vmatpush1.msra.mxu0 0.0
        %1296 = vmatprep.subr.mxu0 0.0
        %1297 = vmatpush1.msra.mxu0 0.0
        %1298 = vmatprep.subr.mxu0 0.0
        %1299 = vmatpush1.msra.mxu0 0.0
        %1300 = vmatprep.subr.mxu0 0.0
        %1301 = vmatpush1.msra.mxu0 0.0
        %1302 = vmatprep.subr.mxu0 0.0
        %1303 = vmatpush1.msra.mxu0 0.0
        %1304 = vmatprep.subr.mxu0 0.0
        %1305 = vmatpush1.msra.mxu0 0.0
        %1306 = vmatprep.subr.mxu0 0.0
        %1307 = vmatpush1.msra.mxu0 %v1271
        %1308 = vmatprep.subr.mxu0 0.0
        %1309 = vmatpush2.msra.mxu0 0.0
        %1310 = vmatprep.subr.mxu0 0.0
        %1311 = vmatpush2.msra.mxu0 0.0
        %1312 = vmatprep.subr.mxu0 0.0
        %1313 = vmatpush2.msra.mxu0 0.0
        %1314 = vmatprep.subr.mxu0 0.0
        %1315 = vmatpush2.msra.mxu0 0.0
        %1316 = vmatprep.subr.mxu0 0.0
        %1317 = vmatpush2.msra.mxu0 0.0
        %1318 = vmatprep.subr.mxu0 0.0
        %1319 = vmatpush2.msra.mxu0 0.0
        %1320 = vmatprep.subr.mxu0 0.0
        %1321 = vmatpush2.msra.mxu0 0.0
        %1322 = vmatprep.subr.mxu0 0.0
        %1323 = vmatpush2.msra.mxu0 0.0
        %1324 = vmatprep.subr.mxu0 0.0
        %1325 = vmatpush2.msra.mxu0 0.0
        %1326 = vmatprep.subr.mxu0 0.0
        %1327 = vmatpush2.msra.mxu0 0.0
        %1328 = vmatprep.subr.mxu0 0.0
        %1329 = vmatpush2.msra.mxu0 0.0
        %1330 = vmatprep.subr.mxu0 0.0
        %1331 = vmatpush2.msra.mxu0 0.0
        %1332 = vmatprep.subr.mxu0 0.0
        %1333 = vmatpush2.msra.mxu0 0.0
        %1334 = vmatprep.subr.mxu0 0.0
        %1335 = vmatpush2.msra.mxu0 0.0
        %1336 = vmatprep.subr.mxu0 0.0
        %1337 = vmatpush2.msra.mxu0 0.0
        %1338 = vmatprep.subr.mxu0 0.0
        %1339 = vmatpush2.msra.mxu0 0.0
        %1340 = vmatprep.mubr.f32.mxu0 0.0
        %1341 = vmatmul.mubr.f32.gmra.mxu0 %v1274
        %v1342 = vpop.f32.mrf.mxu0
        %v1343 = vadd.f32 0.0, %v1342
        %v1344 = vpop.f32.mrf.mxu0
        %1345 = vdwg.mxu0
        %1347 = vrot.lane.b32.xlu0 %v1191, 8
        %v1348 = vpop.permute.xlu0 %1347
        %1351 = vrot.lane.b32.xlu0 %v1267, 16
        %v1352 = vpop.permute.xlu0 %1351
        %1355 = vrot.lane.b32.xlu0 %v1343, 24
        %v1356 = vpop.permute.xlu0 %1355
        %v1358 = vsel %vm677, %v1114, %v1348
        %vm1359 = vcmask 130048
        %v1360 = vsel %vm1359, %v1358, %v1352
        %vm1361 = vcmask 195584
        %v1362 = vsel %vm1361, %v1360, %v1356
        %v1363 = vld [vmem:[#allocation11] sm:$0xff]
        %v1364 = vld [vmem:[#allocation11 + $0x8] sm:$0xff]
        %v1365 = vld [vmem:[#allocation11 + $0x10] sm:$0xff]
        %v1366 = vld [vmem:[#allocation11 + $0x18] sm:$0xff]
        %v1367 = vld [vmem:[%s9] sm:$0x1]
        %v1369 = vlaneseq
        %v1370 = vshrl.u32 %v1369, 7
        %v1371 = vsub.s32 0, %v1370
        %v1372 = vrot.slane %v1367, %v1371
        %v1375 = vsel %vm516, %v1362, 0
        %1377 = vmatprep.subr.mxu0 0.0
        %1378 = vmatpush1.msra.mxu0 0.0
        %1379 = vmatprep.subr.mxu0 0.0
        %1380 = vmatpush1.msra.mxu0 0.0
        %1381 = vmatprep.subr.mxu0 0.0
        %1382 = vmatpush1.msra.mxu0 0.0
        %1383 = vmatprep.subr.mxu0 0.0
        %1384 = vmatpush1.msra.mxu0 0.0
        %1385 = vmatprep.subr.mxu0 0.0
        %1386 = vmatpush1.msra.mxu0 0.0
        %1387 = vmatprep.subr.mxu0 0.0
        %1388 = vmatpush1.msra.mxu0 0.0
        %1389 = vmatprep.subr.mxu0 0.0
        %1390 = vmatpush1.msra.mxu0 0.0
        %1391 = vmatprep.subr.mxu0 0.0
        %1392 = vmatpush1.msra.mxu0 0.0
        %1393 = vmatprep.subr.mxu0 0.0
        %1394 = vmatpush1.msra.mxu0 0.0
        %1395 = vmatprep.subr.mxu0 0.0
        %1396 = vmatpush1.msra.mxu0 0.0
        %1397 = vmatprep.subr.mxu0 0.0
        %1398 = vmatpush1.msra.mxu0 0.0
        %1399 = vmatprep.subr.mxu0 0.0
        %1400 = vmatpush1.msra.mxu0 0.0
        %1401 = vmatprep.subr.mxu0 0.0
        %1402 = vmatpush1.msra.mxu0 %v1366
        %1403 = vmatprep.subr.mxu0 0.0
        %1404 = vmatpush1.msra.mxu0 %v1365
        %1405 = vmatprep.subr.mxu0 0.0
        %1406 = vmatpush1.msra.mxu0 %v1364
        %1407 = vmatprep.subr.mxu0 0.0
        %1408 = vmatpush1.msra.mxu0 %v1363
        %1409 = vmatprep.subr.mxu0 0.0
        %1410 = vmatpush2.msra.mxu0 0.0
        %1411 = vmatprep.subr.mxu0 0.0
        %1412 = vmatpush2.msra.mxu0 0.0
        %1413 = vmatprep.subr.mxu0 0.0
        %1414 = vmatpush2.msra.mxu0 0.0
        %1415 = vmatprep.subr.mxu0 0.0
        %1416 = vmatpush2.msra.mxu0 0.0
        %1417 = vmatprep.subr.mxu0 0.0
        %1418 = vmatpush2.msra.mxu0 0.0
        %1419 = vmatprep.subr.mxu0 0.0
        %1420 = vmatpush2.msra.mxu0 0.0
        %1421 = vmatprep.subr.mxu0 0.0
        %1422 = vmatpush2.msra.mxu0 0.0
        %1423 = vmatprep.subr.mxu0 0.0
        %1424 = vmatpush2.msra.mxu0 0.0
        %1425 = vmatprep.subr.mxu0 0.0
        %1426 = vmatpush2.msra.mxu0 0.0
        %1427 = vmatprep.subr.mxu0 0.0
        %1428 = vmatpush2.msra.mxu0 0.0
        %1429 = vmatprep.subr.mxu0 0.0
        %1430 = vmatpush2.msra.mxu0 0.0
        %1431 = vmatprep.subr.mxu0 0.0
        %1432 = vmatpush2.msra.mxu0 0.0
        %1433 = vmatprep.subr.mxu0 0.0
        %1434 = vmatpush2.msra.mxu0 0.0
        %1435 = vmatprep.subr.mxu0 0.0
        %1436 = vmatpush2.msra.mxu0 0.0
        %1437 = vmatprep.subr.mxu0 0.0
        %1438 = vmatpush2.msra.mxu0 0.0
        %1439 = vmatprep.subr.mxu0 0.0
        %1440 = vmatpush2.msra.mxu0 0.0
        %1441 = vmatprep.mubr.f32.mxu0 0.0
        %1442 = vmatmul.mubr.f32.gmra.mxu0 %v1375
        %v1443 = vpop.f32.mrf.mxu0
        %v1444 = vadd.f32 %v1372, %v1443
        %v1445 = vpop.f32.mrf.mxu0
        %1446 = vdwg.mxu0
        %1447 = vst.msk [vmem:[%s500] sm:$0xff] %vm516, %v1444
        %s1448 = sand.u32 %s270, 1
        %s1449 = scalar_lea.sflag [#allocation4], %s1448
        %s1450 = sand.u32 %s270, 1
        %s1451 = smul.addr %s1450, 8
        %s1452 = scalar_lea.vmem [#allocation13], %s1451
        // Predicated region
        $region85: #{tpu_custom_call.1} parent=59 // pred_check
          %p1453 = pneg %p280
        $region86: #{tpu_custom_call.1} parent=59 // pred_check_branch
          %1455 = sbr.rel (%p1453) target = $region88
        $region87: #{tpu_custom_call.1} parent=59 // pred_region
          %s1457 = ssub.s32 128, 128
          %1458 = vsyncadd %s1449, %s1457
          %s1459 = smul.addr %s32, 128
          %s1460 = scalar_lea.hbm %s10, %s1459
          %s1462 = sshll.u32 %s1452, 4
          %s1463 = int_to_ptr.vmem [resolvable:$true] %s1462
          %1465 = dma.vmem_to_hbm [thread:$0]  %s1463, 128, %s1460, %s1449
        $region88: #{tpu_custom_call.1} parent=59 // pred_fallthru
          _
      $region60: #{tpu_custom_call.1} parent=5 // pred_fallthru
        _
      %p1466 = scmp.le.s32.totalorder 2, %s27
      // Predicated region
      $region89: #{tpu_custom_call.1} parent=5 // pred_check
        %p1467 = pneg %p1466
      $region90: #{tpu_custom_call.1} parent=5 // pred_check_branch
        %1469 = sbr.rel (%p1467) target = $region92
      $region91: #{tpu_custom_call.1} parent=5 // pred_region
        %s1470 = ssub.s32 %s27, 2
        // Predicated region
        $region93: #{tpu_custom_call.1} parent=91 // pred_check
          %p1471 = pneg %p286
        $region94: #{tpu_custom_call.1} parent=91 // pred_check_branch
          %1473 = sbr.rel (%p1471) target = $region96
        $region95: #{tpu_custom_call.1} parent=91 // pred_region
          %s1474 = sand.u32 %s271, 1
          %s1475 = scalar_lea.sflag [#allocation4], %s1474
          %s1476 = sand.u32 %s271, 1
          %s1477 = smul.addr %s1476, 8
          %s1478 = scalar_lea.vmem [#allocation13], %s1477
          %1479 = dma.done %s1475, 128
        $region96: #{tpu_custom_call.1} parent=91 // pred_fallthru
          _
      $region92: #{tpu_custom_call.1} parent=5 // pred_fallthru
        _
    $region6: #{tpu_custom_call.1} parent=1 // loop_footer
      %s31 = sadd.s32 1, %s27
    $region7: #{tpu_custom_call.1} parent=1 // loop_footer_branch
      %26 = sbr.rel target = $region3
    $region8: #{tpu_custom_call.1} parent=1 // loop_exit
      _
    %1480 = vsyncpa [#allocation3], 1
    %s1481 = scalar_lea.sflag [#allocation3], 1
    %1482 = vsyncpa %s1481, 1
    %1483 = vsyncpa [#allocation6], 1
    %s1484 = scalar_lea.sflag [#allocation6], 1
    %1485 = vsyncpa %s1484, 1
    %1486 = vsyncpa [#allocation9], 1
    %1487 = vsyncpa [#allocation12], 1
    %1488 = vsyncpa [#allocation4], 1
    %s1489 = scalar_lea.sflag [#allocation4], 1
    %1490 = vsyncpa %s1489, 1

</llo_original>
